<compile_context>
chip_gen: v7x
topology: tpu7x:2x2x1
jax: 0.10.0
libtpu: 0.0.40
codegen_flags: <defaults>
</compile_context>

<pallas_src>
import functools
import math

import jax
import jax.numpy as jnp
from jax.experimental import pallas as pl
from jax.experimental.pallas import tpu as pltpu


_LN_EPS = 1e-12
# Scoped VMEM budget: above the 16 / 32 MiB defaults (v5e / v6e+v7x), below
# v7x's 64 MiB physical VMEM.  TODO(synk): re-derive per chip generation and
# per production (S, I) working set.
_VMEM_LIMIT = 48 * 1024 * 1024


# ----------------------------------------------------------------------------
# In-kernel helpers (f32 math)
# ----------------------------------------------------------------------------

def _layernorm(x, g, b, eps):
    mean = jnp.mean(x, axis=-1, keepdims=True)
    var = jnp.mean((x - mean) ** 2, axis=-1, keepdims=True)
    return (x - mean) * jax.lax.rsqrt(var + eps) * g + b


def _gelu(x):
    # TODO(synk): HF BERT uses erf-based GELU; tanh approximation used here.
    return 0.5 * x * (1.0 + jnp.tanh(0.7978845608028654 * (x + 0.044715 * x * x * x)))


# ----------------------------------------------------------------------------
# Kernels
# ----------------------------------------------------------------------------

def _embed_ln_kernel(word_ref, pt_ref, g_ref, b_ref, o_ref, *, eps):
    """o[b] = LayerNorm(word_emb[b] + (pos_emb + type_emb)) for one batch row."""
    x = word_ref[0].astype(jnp.float32) + pt_ref[...]
    o_ref[0] = _layernorm(x, g_ref[...], b_ref[...], eps)


def _encoder_kernel(x_ref, mask_ref, wqkv_ref, bqkv_ref, wo_ref, bo_ref,
                    ln1g_ref, ln1b_ref, w1_ref, b1_ref, w2_ref, b2_ref,
                    ln2g_ref, ln2b_ref, o_ref, ctx_scr, *, H, eps):
    """One grid step = (batch row b, layer l).  o_ref is the (1, S, D) hidden
    state carried (VMEM-resident) across the inner "arbitrary" layer axis."""
    S, D = x_ref.shape[1], x_ref.shape[2]
    DH = D // H
    scale = 1.0 / math.sqrt(DH)

    # Seed the carry with the embedding output at the first layer.
    @pl.when(pl.program_id(1) == 0)
    def _():
        o_ref[...] = x_ref[...]

    x = o_ref[0]                                          # (S, D) f32 layer input
    x_bf = x.astype(jnp.bfloat16)

    # Fused QKV projection: one MXU pass, bf16 operands, f32 accumulation.
    qkv = (jnp.dot(x_bf, wqkv_ref[0], preferred_element_type=jnp.float32)
           + bqkv_ref[0])                                 # (S, 3D) f32

    # Additive attention mask; broadcast hoisted out of the head loop.
    amask = jnp.broadcast_to(mask_ref[0].astype(jnp.float32), (S, S))

    # Multi-head self-attention.  Each head's context is written into its lane
    # slice of ctx_scr so the output projection is a single K = D matmul.
    for h in range(H):
        q = qkv[:, h * DH:(h + 1) * DH].astype(jnp.bfloat16)
        k = qkv[:, D + h * DH:D + (h + 1) * DH].astype(jnp.bfloat16)
        v = qkv[:, 2 * D + h * DH:2 * D + (h + 1) * DH].astype(jnp.bfloat16)
        s = jax.lax.dot_general(q, k, (((1,), (1,)), ((), ())),
                                preferred_element_type=jnp.float32)
        s = s * scale + amask
        s = s - jnp.max(s, axis=-1, keepdims=True)
        p = jnp.exp(s)
        p = p * pl.reciprocal(jnp.sum(p, axis=-1, keepdims=True), approx=True)
        ctx_scr[:, h * DH:(h + 1) * DH] = jnp.dot(
            p.astype(jnp.bfloat16), v, preferred_element_type=jnp.float32)

    attn = (jnp.dot(ctx_scr[...].astype(jnp.bfloat16), wo_ref[0],
                    preferred_element_type=jnp.float32) + bo_ref[0])
    h1 = _layernorm(attn + x, ln1g_ref[0], ln1b_ref[0], eps)

    ffn = _gelu(jnp.dot(h1.astype(jnp.bfloat16), w1_ref[0],
                        preferred_element_type=jnp.float32) + b1_ref[0])
    ffn = (jnp.dot(ffn.astype(jnp.bfloat16), w2_ref[0],
                   preferred_element_type=jnp.float32) + b2_ref[0])
    o_ref[0] = _layernorm(ffn + h1, ln2g_ref[0], ln2b_ref[0], eps)


def _pool_heads_kernel(mask_ref, h_ref, hw_ref, hb_ref, o_ref):
    """Masked-mean pooling for one batch row fused with all task heads
    (single lane-dense (1, D) @ (D, NP) matmul; logits sliced on host)."""
    m = mask_ref[0].astype(jnp.float32)                               # (1, S)
    # Matches torch `pooler / pooler.sum()` exactly (NaN if mask is all-zero).
    w = m / jnp.sum(m, axis=-1, keepdims=True)
    pooled = jnp.dot(w, h_ref[0], preferred_element_type=jnp.float32)  # (1, D)
    # TODO(synk): dropout between pooler and task heads omitted (inference).
    o_ref[0] = (jnp.dot(pooled.astype(jnp.bfloat16), hw_ref[...],
                        preferred_element_type=jnp.float32) + hb_ref[...])


# ----------------------------------------------------------------------------
# Wrappers
# ----------------------------------------------------------------------------

def embed_layernorm(word, pos_type, gamma, beta):
    B, S, D = word.shape
    return pl.pallas_call(
        functools.partial(_embed_ln_kernel, eps=_LN_EPS),
        out_shape=jax.ShapeDtypeStruct((B, S, D), jnp.float32),
        grid=(B,),
        in_specs=[pl.BlockSpec((1, S, D), lambda b: (b, 0, 0)),
                  pl.BlockSpec((S, D), lambda b: (0, 0)),
                  pl.BlockSpec((1, D), lambda b: (0, 0)),
                  pl.BlockSpec((1, D), lambda b: (0, 0))],
        out_specs=pl.BlockSpec((1, S, D), lambda b: (b, 0, 0)),
        compiler_params=pltpu.CompilerParams(
            dimension_semantics=("parallel",),
            vmem_limit_bytes=_VMEM_LIMIT),
    )(word, pos_type, gamma, beta)


def bert_encoder(x, mask_add, p, cfg):
    """Full encoder stack: grid = (batch, layer); weights indexed by the layer
    axis (prefetched), hidden state carried in the output block across layers."""
    B, S, D = x.shape
    L, I, H = cfg["L"], cfg["I"], cfg["H"]

    def amap(b, l):      # activations / mask / output: one block per batch row
        return (b, 0, 0)

    def wmap(b, l):      # stacked layer weights: one block per layer
        return (l, 0, 0)

    return pl.pallas_call(
        functools.partial(_encoder_kernel, H=H, eps=_LN_EPS),
        out_shape=jax.ShapeDtypeStruct((B, S, D), jnp.float32),
        grid=(B, L),
        in_specs=[
            pl.BlockSpec((1, S, D), amap),          # embeddings (read at l == 0)
            pl.BlockSpec((1, 1, S), amap),          # additive attention mask
            pl.BlockSpec((1, D, 3 * D), wmap),      # Wqkv  (bf16)
            pl.BlockSpec((1, 1, 3 * D), wmap),      # bqkv
            pl.BlockSpec((1, D, D), wmap),          # Wo    (bf16)
            pl.BlockSpec((1, 1, D), wmap),          # bo
            pl.BlockSpec((1, 1, D), wmap),          # ln1 gamma
            pl.BlockSpec((1, 1, D), wmap),          # ln1 beta
            pl.BlockSpec((1, D, I), wmap),          # W1    (bf16)
            pl.BlockSpec((1, 1, I), wmap),          # b1
            pl.BlockSpec((1, I, D), wmap),          # W2    (bf16)
            pl.BlockSpec((1, 1, D), wmap),          # b2
            pl.BlockSpec((1, 1, D), wmap),          # ln2 gamma
            pl.BlockSpec((1, 1, D), wmap),          # ln2 beta
        ],
        out_specs=pl.BlockSpec((1, S, D), amap),
        scratch_shapes=[pltpu.VMEM((S, D), jnp.float32)],
        compiler_params=pltpu.CompilerParams(
            dimension_semantics=("parallel", "arbitrary"),
            vmem_limit_bytes=_VMEM_LIMIT),
    )(x, mask_add,
      p["wqkv"], p["bqkv"], p["wo"], p["bo"],
      p["ln1_g"], p["ln1_b"], p["w1"], p["b1"], p["w2"], p["b2"],
      p["ln2_g"], p["ln2_b"])


def pool_and_heads(pool_mask, hidden, head_w, head_b):
    B, S, D = hidden.shape
    NP = head_w.shape[1]
    out = pl.pallas_call(
        _pool_heads_kernel,
        out_shape=jax.ShapeDtypeStruct((B, 1, NP), jnp.float32),
        grid=(B,),
        in_specs=[pl.BlockSpec((1, 1, S), lambda b: (b, 0, 0)),
                  pl.BlockSpec((1, S, D), lambda b: (b, 0, 0)),
                  pl.BlockSpec((D, NP), lambda b: (0, 0)),
                  pl.BlockSpec((1, NP), lambda b: (0, 0))],
        out_specs=pl.BlockSpec((1, 1, NP), lambda b: (b, 0, 0)),
        compiler_params=pltpu.CompilerParams(
            dimension_semantics=("parallel",),
            vmem_limit_bytes=_VMEM_LIMIT),
    )(pool_mask, hidden, head_w, head_b)
    return out.reshape(B, NP)


# ----------------------------------------------------------------------------
# Model
# ----------------------------------------------------------------------------

def init_params(key, cfg, task_label_counts):
    D, I, V, NPOS, L = cfg["D"], cfg["I"], cfg["V"], cfg["NPOS"], cfg["L"]

    def nrm(k, shape):
        return 0.02 * jax.random.normal(k, shape, jnp.float32)

    k_word, k_pos, k_typ, k_wqkv, k_wo, k_w1, k_w2, k_head = jax.random.split(key, 8)

    params = {
        # Embedding tables (word table stored bf16: dominant HBM footprint).
        "word_emb": nrm(k_word, (V, D)).astype(jnp.bfloat16),
        "pos_emb": nrm(k_pos, (NPOS, D)),
        "type_emb": nrm(k_typ, (2, D)),
        "emb_ln_g": jnp.ones((1, D), jnp.float32),
        "emb_ln_b": jnp.zeros((1, D), jnp.float32),
        # Encoder weights stacked along the layer axis (grid axis l); matmul
        # operands in bf16, biases / LayerNorm params in f32.
        "wqkv": nrm(k_wqkv, (L, D, 3 * D)).astype(jnp.bfloat16),
        "bqkv": jnp.zeros((L, 1, 3 * D), jnp.float32),
        "wo": nrm(k_wo, (L, D, D)).astype(jnp.bfloat16),
        "bo": jnp.zeros((L, 1, D), jnp.float32),
        "ln1_g": jnp.ones((L, 1, D), jnp.float32),
        "ln1_b": jnp.zeros((L, 1, D), jnp.float32),
        "w1": nrm(k_w1, (L, D, I)).astype(jnp.bfloat16),
        "b1": jnp.zeros((L, 1, I), jnp.float32),
        "w2": nrm(k_w2, (L, I, D)).astype(jnp.bfloat16),
        "b2": jnp.zeros((L, 1, D), jnp.float32),
        "ln2_g": jnp.ones((L, 1, D), jnp.float32),
        "ln2_b": jnp.zeros((L, 1, D), jnp.float32),
    }

    # All task heads concatenated into a single lane-padded (D, NP) matrix so
    # the classifier is one lane-dense matmul; per-task slices on the host.
    total = sum(task_label_counts)
    NP = ((total + 127) // 128) * 128
    head_w = jnp.zeros((D, NP), jnp.float32)
    head_keys = jax.random.split(k_head, len(task_label_counts))
    off = 0
    for t, n in enumerate(task_label_counts):
        head_w = head_w.at[:, off:off + n].set(nrm(head_keys[t], (D, n)))
        off += n
    params["head_w"] = head_w.astype(jnp.bfloat16)
    params["head_b"] = jnp.zeros((1, NP), jnp.float32)
    return params


def bert_multitask_forward(params, input_ids, attention_mask, input_mask,
                           task_ids, cfg):
    """Equivalent of BERTMultitaskClassifier.forward (pool=True, no BERT pooler)."""
    B, S = input_ids.shape
    tasks = cfg["tasks"]

    # TODO(synk): embedding-table gather stays in plain JAX (data-dependent gather).
    word = params["word_emb"][input_ids]                                 # (B,S,D) bf16
    # TODO(synk): token_type_ids assumed all-zero, position_ids = arange(S).
    pos_type = params["pos_emb"][:S] + params["type_emb"][0]             # (S,D) f32

    x = embed_layernorm(word, pos_type, params["emb_ln_g"], params["emb_ln_b"])

    # Additive attention mask, HF convention: (1 - mask) * large_negative.
    mask_add = ((1.0 - attention_mask.astype(jnp.float32)) * -1e9).reshape(B, 1, S)

    # TODO(synk): dropout inside BERT omitted (inference / eval semantics).
    hidden = bert_encoder(x, mask_add, params, cfg)

    pool_mask = input_mask.astype(jnp.float32).reshape(B, 1, S)
    logits_all = pool_and_heads(pool_mask, hidden, params["head_w"], params["head_b"])

    logits, off = [], 0
    for n in tasks:
        logits.append(logits_all[:, off:off + n])
        off += n
    task_masks = [task_ids == t for t in range(len(tasks))]
    return logits, task_masks


# ----------------------------------------------------------------------------
# Main
# ----------------------------------------------------------------------------

if __name__ == "__main__":
    task_label_counts = (3, 2)          # two tasks: 3-way and 2-way heads
    cfg = dict(B=2, S=8, D=32, H=4, I=64, V=128, NPOS=16, L=2,
               tasks=task_label_counts)
    B, S, V = cfg["B"], cfg["S"], cfg["V"]

    key = jax.random.PRNGKey(0)
    k_params, k_ids = jax.random.split(key)

    params = init_params(k_params, cfg, task_label_counts)

    input_ids = jax.random.randint(k_ids, (B, S), 0, V, dtype=jnp.int32)
    # pad out the last 2 positions of each sequence
    attention_mask = jnp.ones((B, S), jnp.int32).at[:, S - 2:].set(0)
    input_mask = attention_mask
    task_ids = jnp.array([0, 1], jnp.int32)

    fwd = jax.jit(functools.partial(bert_multitask_forward, cfg=cfg))
    logits, task_masks = fwd(params, input_ids, attention_mask, input_mask, task_ids)
    logits, task_masks = jax.block_until_ready((logits, task_masks))

    assert len(logits) == len(task_label_counts)
    for t, n_labels in enumerate(task_label_counts):
        assert logits[t].shape == (B, n_labels), logits[t].shape
        assert bool(jnp.all(jnp.isfinite(logits[t])))
        assert task_masks[t].shape == (B,)
    print("KERNEL_OK")
</pallas_src>

<mosaic_0001>
module attributes {stable_mosaic.version = 11 : i64} {
  func.func @_embed_ln_kernel(%arg0: i32, %arg1: memref<1x8x32xbf16, #tpu.memory_space<vmem>>, %arg2: memref<8x32xf32, #tpu.memory_space<vmem>>, %arg3: memref<1x32xf32, #tpu.memory_space<vmem>>, %arg4: memref<1x32xf32, #tpu.memory_space<vmem>>, %arg5: memref<1x8x32xf32, #tpu.memory_space<vmem>>) attributes {dimension_semantics = [#tpu.dimension_semantics<parallel>], iteration_bounds = array<i64: 2>, scalar_prefetch = 0 : i64, scratch_operands = 0 : i64, tpu.core_type = #tpu.core_type<tc>, window_params = [{transform_indices = @transform_0, window_bounds = array<i64: 1, 8, 32>}, {pipeline_mode = #tpu.pipeline_mode<synchronous>, transform_indices = @transform_1, window_bounds = array<i64: 8, 32>}, {pipeline_mode = #tpu.pipeline_mode<synchronous>, transform_indices = @transform_2, window_bounds = array<i64: 1, 32>}, {pipeline_mode = #tpu.pipeline_mode<synchronous>, transform_indices = @transform_3, window_bounds = array<i64: 1, 32>}, {transform_indices = @transform_4, window_bounds = array<i64: 1, 8, 32>}]} {
    %c0 = arith.constant 0 : index
    %c0_0 = arith.constant 0 : index
    %c0_1 = arith.constant 0 : index
    %0 = vector.load %arg1[%c0, %c0_0, %c0_1] : memref<1x8x32xbf16, #tpu.memory_space<vmem>>, vector<1x8x32xbf16>
    %1 = vector.shape_cast %0 : vector<1x8x32xbf16> to vector<8x32xbf16>
    %2 = arith.extf %1 : vector<8x32xbf16> to vector<8x32xf32>
    %c0_2 = arith.constant 0 : index
    %c0_3 = arith.constant 0 : index
    %3 = vector.load %arg2[%c0_2, %c0_3] : memref<8x32xf32, #tpu.memory_space<vmem>>, vector<8x32xf32>
    %4 = arith.addf %2, %3 : vector<8x32xf32>
    %c0_4 = arith.constant 0 : index
    %c0_5 = arith.constant 0 : index
    %5 = vector.load %arg3[%c0_4, %c0_5] : memref<1x32xf32, #tpu.memory_space<vmem>>, vector<1x32xf32>
    %c0_6 = arith.constant 0 : index
    %c0_7 = arith.constant 0 : index
    %6 = vector.load %arg4[%c0_6, %c0_7] : memref<1x32xf32, #tpu.memory_space<vmem>>, vector<1x32xf32>
    %cst = arith.constant dense<0.000000e+00> : vector<8xf32>
    %7 = vector.multi_reduction <add>, %4, %cst [1] : vector<8x32xf32> to vector<8xf32>
    %8 = vector.shape_cast %7 : vector<8xf32> to vector<8x1xf32>
    %cst_8 = arith.constant 3.200000e+01 : f32
    %9 = vector.broadcast %cst_8 : f32 to vector<8x1xf32>
    %10 = arith.divf %8, %9 : vector<8x1xf32>
    %11 = vector.broadcast %10 : vector<8x1xf32> to vector<8x32xf32>
    %12 = arith.subf %4, %11 : vector<8x32xf32>
    %13 = arith.mulf %12, %12 : vector<8x32xf32>
    %cst_9 = arith.constant dense<0.000000e+00> : vector<8xf32>
    %14 = vector.multi_reduction <add>, %13, %cst_9 [1] : vector<8x32xf32> to vector<8xf32>
    %15 = vector.shape_cast %14 : vector<8xf32> to vector<8x1xf32>
    %cst_10 = arith.constant 3.200000e+01 : f32
    %16 = vector.broadcast %cst_10 : f32 to vector<8x1xf32>
    %17 = arith.divf %15, %16 : vector<8x1xf32>
    %18 = vector.broadcast %10 : vector<8x1xf32> to vector<8x32xf32>
    %19 = arith.subf %4, %18 : vector<8x32xf32>
    %cst_11 = arith.constant 9.99999996E-13 : f32
    %20 = vector.broadcast %cst_11 : f32 to vector<8x1xf32>
    %21 = arith.addf %17, %20 : vector<8x1xf32>
    %22 = math.rsqrt %21 : vector<8x1xf32>
    %23 = vector.broadcast %22 : vector<8x1xf32> to vector<8x32xf32>
    %24 = arith.mulf %19, %23 : vector<8x32xf32>
    %25 = vector.broadcast %5 : vector<1x32xf32> to vector<8x32xf32>
    %26 = arith.mulf %24, %25 : vector<8x32xf32>
    %27 = vector.broadcast %6 : vector<1x32xf32> to vector<8x32xf32>
    %28 = arith.addf %26, %27 : vector<8x32xf32>
    %c0_12 = arith.constant 0 : index
    %c0_13 = arith.constant 0 : index
    %c0_14 = arith.constant 0 : index
    %29 = vector.load %arg5[%c0_12, %c0_13, %c0_14] : memref<1x8x32xf32, #tpu.memory_space<vmem>>, vector<1x8x32xf32>
    %30 = vector.shape_cast %29 : vector<1x8x32xf32> to vector<8x32xf32>
    %31 = vector.shape_cast %28 : vector<8x32xf32> to vector<1x8x32xf32>
    tpu.vector_store %arg5[%c0_12, %c0_13, %c0_14], %31 {strides = array<i32>} : memref<1x8x32xf32, #tpu.memory_space<vmem>>, vector<1x8x32xf32>,
    return
  }
  func.func @transform_0(%arg0: i32) -> (i32, i32, i32) {
    %c0_i32 = arith.constant 0 : i32
    %c0_i32_0 = arith.constant 0 : i32
    %c0_i32_1 = arith.constant 0 : i32
    return %arg0, %c0_i32, %c0_i32_0 : i32, i32, i32
  }
  func.func @transform_1(%arg0: i32) -> (i32, i32) {
    %c0_i32 = arith.constant 0 : i32
    %c0_i32_0 = arith.constant 0 : i32
    %c0_i32_1 = arith.constant 0 : i32
    return %c0_i32, %c0_i32_0 : i32, i32
  }
  func.func @transform_2(%arg0: i32) -> (i32, i32) {
    %c0_i32 = arith.constant 0 : i32
    %c0_i32_0 = arith.constant 0 : i32
    %c0_i32_1 = arith.constant 0 : i32
    return %c0_i32, %c0_i32_0 : i32, i32
  }
  func.func @transform_3(%arg0: i32) -> (i32, i32) {
    %c0_i32 = arith.constant 0 : i32
    %c0_i32_0 = arith.constant 0 : i32
    %c0_i32_1 = arith.constant 0 : i32
    return %c0_i32, %c0_i32_0 : i32, i32
  }
  func.func @transform_4(%arg0: i32) -> (i32, i32, i32) {
    %c0_i32 = arith.constant 0 : i32
    %c0_i32_0 = arith.constant 0 : i32
    %c0_i32_1 = arith.constant 0 : i32
    return %arg0, %c0_i32, %c0_i32_0 : i32, i32, i32
  }
}

module attributes {stable_mosaic.version = 11 : i64} {
  func.func @_pool_heads_kernel(%arg0: i32, %arg1: memref<1x1x8xf32, #tpu.memory_space<vmem>>, %arg2: memref<1x8x32xf32, #tpu.memory_space<vmem>>, %arg3: memref<32x128xbf16, #tpu.memory_space<vmem>>, %arg4: memref<1x128xf32, #tpu.memory_space<vmem>>, %arg5: memref<1x1x128xf32, #tpu.memory_space<vmem>>) attributes {dimension_semantics = [#tpu.dimension_semantics<parallel>], iteration_bounds = array<i64: 2>, scalar_prefetch = 0 : i64, scratch_operands = 0 : i64, tpu.core_type = #tpu.core_type<tc>, window_params = [{transform_indices = @transform_0, window_bounds = array<i64: 1, 1, 8>}, {transform_indices = @transform_1, window_bounds = array<i64: 1, 8, 32>}, {pipeline_mode = #tpu.pipeline_mode<synchronous>, transform_indices = @transform_2, window_bounds = array<i64: 32, 128>}, {pipeline_mode = #tpu.pipeline_mode<synchronous>, transform_indices = @transform_3, window_bounds = array<i64: 1, 128>}, {transform_indices = @transform_4, window_bounds = array<i64: 1, 1, 128>}]} {
    %c0 = arith.constant 0 : index
    %c0_0 = arith.constant 0 : index
    %c0_1 = arith.constant 0 : index
    %0 = vector.load %arg1[%c0, %c0_0, %c0_1] : memref<1x1x8xf32, #tpu.memory_space<vmem>>, vector<1x1x8xf32>
    %1 = vector.shape_cast %0 : vector<1x1x8xf32> to vector<1x8xf32>
    %cst = arith.constant dense<0.000000e+00> : vector<1xf32>
    %2 = vector.multi_reduction <add>, %1, %cst [1] : vector<1x8xf32> to vector<1xf32>
    %3 = vector.shape_cast %2 : vector<1xf32> to vector<1x1xf32>
    %4 = vector.broadcast %3 : vector<1x1xf32> to vector<1x8xf32>
    %5 = arith.divf %1, %4 : vector<1x8xf32>
    %c0_2 = arith.constant 0 : index
    %c0_3 = arith.constant 0 : index
    %c0_4 = arith.constant 0 : index
    %6 = vector.load %arg2[%c0_2, %c0_3, %c0_4] : memref<1x8x32xf32, #tpu.memory_space<vmem>>, vector<1x8x32xf32>
    %7 = vector.shape_cast %6 : vector<1x8x32xf32> to vector<8x32xf32>
    %cst_5 = arith.constant dense<0.000000e+00> : vector<1x32xf32>
    %8 = tpu.matmul %5, %7, %cst_5 {dimension_numbers = #tpu.dot_dimension_numbers<[1], [0], [0], [1], [0, 0, 1, 1], [], []>} : vector<1x8xf32>, vector<8x32xf32>, vector<1x32xf32> -> vector<1x32xf32>
    %9 = arith.truncf %8 : vector<1x32xf32> to vector<1x32xbf16>
    %c0_6 = arith.constant 0 : index
    %c0_7 = arith.constant 0 : index
    %10 = vector.load %arg3[%c0_6, %c0_7] : memref<32x128xbf16, #tpu.memory_space<vmem>>, vector<32x128xbf16>
    %cst_8 = arith.constant dense<0.000000e+00> : vector<1x128xf32>
    %11 = tpu.matmul %9, %10, %cst_8 {dimension_numbers = #tpu.dot_dimension_numbers<[1], [0], [0], [1], [0, 0, 1, 1], [], []>} : vector<1x32xbf16>, vector<32x128xbf16>, vector<1x128xf32> -> vector<1x128xf32>
    %c0_9 = arith.constant 0 : index
    %c0_10 = arith.constant 0 : index
    %12 = vector.load %arg4[%c0_9, %c0_10] : memref<1x128xf32, #tpu.memory_space<vmem>>, vector<1x128xf32>
    %13 = arith.addf %11, %12 : vector<1x128xf32>
    %c0_11 = arith.constant 0 : index
    %c0_12 = arith.constant 0 : index
    %c0_13 = arith.constant 0 : index
    %14 = vector.load %arg5[%c0_11, %c0_12, %c0_13] : memref<1x1x128xf32, #tpu.memory_space<vmem>>, vector<1x1x128xf32>
    %15 = vector.shape_cast %14 : vector<1x1x128xf32> to vector<1x128xf32>
    %16 = vector.shape_cast %13 : vector<1x128xf32> to vector<1x1x128xf32>
    tpu.vector_store %arg5[%c0_11, %c0_12, %c0_13], %16 {strides = array<i32>} : memref<1x1x128xf32, #tpu.memory_space<vmem>>, vector<1x1x128xf32>,
    return
  }
  func.func @transform_0(%arg0: i32) -> (i32, i32, i32) {
    %c0_i32 = arith.constant 0 : i32
    %c0_i32_0 = arith.constant 0 : i32
    %c0_i32_1 = arith.constant 0 : i32
    return %arg0, %c0_i32, %c0_i32_0 : i32, i32, i32
  }
  func.func @transform_1(%arg0: i32) -> (i32, i32, i32) {
    %c0_i32 = arith.constant 0 : i32
    %c0_i32_0 = arith.constant 0 : i32
    %c0_i32_1 = arith.constant 0 : i32
    return %arg0, %c0_i32, %c0_i32_0 : i32, i32, i32
  }
  func.func @transform_2(%arg0: i32) -> (i32, i32) {
    %c0_i32 = arith.constant 0 : i32
    %c0_i32_0 = arith.constant 0 : i32
    %c0_i32_1 = arith.constant 0 : i32
    return %c0_i32, %c0_i32_0 : i32, i32
  }
  func.func @transform_3(%arg0: i32) -> (i32, i32) {
    %c0_i32 = arith.constant 0 : i32
    %c0_i32_0 = arith.constant 0 : i32
    %c0_i32_1 = arith.constant 0 : i32
    return %c0_i32, %c0_i32_0 : i32, i32
  }
  func.func @transform_4(%arg0: i32) -> (i32, i32, i32) {
    %c0_i32 = arith.constant 0 : i32
    %c0_i32_0 = arith.constant 0 : i32
    %c0_i32_1 = arith.constant 0 : i32
    return %arg0, %c0_i32, %c0_i32_0 : i32, i32, i32
  }
}

module attributes {stable_mosaic.version = 11 : i64} {
  func.func @_encoder_kernel(%arg0: i32, %arg1: i32, %arg2: memref<1x8x32xf32, #tpu.memory_space<vmem>>, %arg3: memref<1x1x8xf32, #tpu.memory_space<vmem>>, %arg4: memref<1x32x96xbf16, #tpu.memory_space<vmem>>, %arg5: memref<1x1x96xf32, #tpu.memory_space<vmem>>, %arg6: memref<1x32x32xbf16, #tpu.memory_space<vmem>>, %arg7: memref<1x1x32xf32, #tpu.memory_space<vmem>>, %arg8: memref<1x1x32xf32, #tpu.memory_space<vmem>>, %arg9: memref<1x1x32xf32, #tpu.memory_space<vmem>>, %arg10: memref<1x32x64xbf16, #tpu.memory_space<vmem>>, %arg11: memref<1x1x64xf32, #tpu.memory_space<vmem>>, %arg12: memref<1x64x32xbf16, #tpu.memory_space<vmem>>, %arg13: memref<1x1x32xf32, #tpu.memory_space<vmem>>, %arg14: memref<1x1x32xf32, #tpu.memory_space<vmem>>, %arg15: memref<1x1x32xf32, #tpu.memory_space<vmem>>, %arg16: memref<1x8x32xf32, #tpu.memory_space<vmem>>, %arg17: memref<8x32xf32, #tpu.memory_space<vmem>>) attributes {dimension_semantics = [#tpu.dimension_semantics<parallel>, #tpu.dimension_semantics<arbitrary>], iteration_bounds = array<i64: 2, 2>, scalar_prefetch = 0 : i64, scratch_operands = 1 : i64, tpu.core_type = #tpu.core_type<tc>, window_params = [{transform_indices = @transform_0, window_bounds = array<i64: 1, 8, 32>}, {transform_indices = @transform_1, window_bounds = array<i64: 1, 1, 8>}, {transform_indices = @transform_2, window_bounds = array<i64: 1, 32, 96>}, {transform_indices = @transform_3, window_bounds = array<i64: 1, 1, 96>}, {transform_indices = @transform_4, window_bounds = array<i64: 1, 32, 32>}, {transform_indices = @transform_5, window_bounds = array<i64: 1, 1, 32>}, {transform_indices = @transform_6, window_bounds = array<i64: 1, 1, 32>}, {transform_indices = @transform_7, window_bounds = array<i64: 1, 1, 32>}, {transform_indices = @transform_8, window_bounds = array<i64: 1, 32, 64>}, {transform_indices = @transform_9, window_bounds = array<i64: 1, 1, 64>}, {transform_indices = @transform_10, window_bounds = array<i64: 1, 64, 32>}, {transform_indices = @transform_11, window_bounds = array<i64: 1, 1, 32>}, {transform_indices = @transform_12, window_bounds = array<i64: 1, 1, 32>}, {transform_indices = @transform_13, window_bounds = array<i64: 1, 1, 32>}, {transform_indices = @transform_14, window_bounds = array<i64: 1, 8, 32>}]} {
    %c0_i32 = arith.constant 0 : i32
    %0 = arith.cmpi eq, %arg1, %c0_i32 : i32
    %1 = arith.extui %0 : i1 to i32
    %c0_i32_0 = arith.constant 0 : i32
    %2 = arith.cmpi ne, %1, %c0_i32_0 : i32
    scf.if %2 {
      %c0_89 = arith.constant 0 : index
      %c0_90 = arith.constant 0 : index
      %c0_91 = arith.constant 0 : index
      %204 = vector.load %arg2[%c0_89, %c0_90, %c0_91] : memref<1x8x32xf32, #tpu.memory_space<vmem>>, vector<1x8x32xf32>
      %c0_92 = arith.constant 0 : index
      %c0_93 = arith.constant 0 : index
      %c0_94 = arith.constant 0 : index
      %205 = vector.load %arg16[%c0_92, %c0_93, %c0_94] : memref<1x8x32xf32, #tpu.memory_space<vmem>>, vector<1x8x32xf32>
      tpu.vector_store %arg16[%c0_92, %c0_93, %c0_94], %204 {strides = array<i32>} : memref<1x8x32xf32, #tpu.memory_space<vmem>>, vector<1x8x32xf32>,
    } else {
    }
    %c0 = arith.constant 0 : index
    %c0_1 = arith.constant 0 : index
    %c0_2 = arith.constant 0 : index
    %3 = vector.load %arg16[%c0, %c0_1, %c0_2] : memref<1x8x32xf32, #tpu.memory_space<vmem>>, vector<1x8x32xf32>
    %4 = vector.shape_cast %3 : vector<1x8x32xf32> to vector<8x32xf32>
    %5 = arith.truncf %4 : vector<8x32xf32> to vector<8x32xbf16>
    %c0_3 = arith.constant 0 : index
    %c0_4 = arith.constant 0 : index
    %c0_5 = arith.constant 0 : index
    %6 = vector.load %arg4[%c0_3, %c0_4, %c0_5] : memref<1x32x96xbf16, #tpu.memory_space<vmem>>, vector<1x32x96xbf16>
    %7 = vector.shape_cast %6 : vector<1x32x96xbf16> to vector<32x96xbf16>
    %cst = arith.constant dense<0.000000e+00> : vector<8x96xf32>
    %8 = tpu.matmul %5, %7, %cst {dimension_numbers = #tpu.dot_dimension_numbers<[1], [0], [0], [1], [0, 0, 1, 1], [], []>} : vector<8x32xbf16>, vector<32x96xbf16>, vector<8x96xf32> -> vector<8x96xf32>
    %c0_6 = arith.constant 0 : index
    %c0_7 = arith.constant 0 : index
    %c0_8 = arith.constant 0 : index
    %9 = vector.load %arg5[%c0_6, %c0_7, %c0_8] : memref<1x1x96xf32, #tpu.memory_space<vmem>>, vector<1x1x96xf32>
    %10 = vector.shape_cast %9 : vector<1x1x96xf32> to vector<1x96xf32>
    %11 = vector.broadcast %10 : vector<1x96xf32> to vector<8x96xf32>
    %12 = arith.addf %8, %11 : vector<8x96xf32>
    %c0_9 = arith.constant 0 : index
    %c0_10 = arith.constant 0 : index
    %c0_11 = arith.constant 0 : index
    %13 = vector.load %arg3[%c0_9, %c0_10, %c0_11] : memref<1x1x8xf32, #tpu.memory_space<vmem>>, vector<1x1x8xf32>
    %14 = vector.shape_cast %13 : vector<1x1x8xf32> to vector<1x8xf32>
    %15 = vector.shape_cast %14 : vector<1x8xf32> to vector<1x8xf32>
    %16 = vector.broadcast %15 : vector<1x8xf32> to vector<8x8xf32>
    %17 = vector.extract_strided_slice %12 {offsets = [0, 0], sizes = [8, 8], strides = [1, 1]} : vector<8x96xf32> to vector<8x8xf32>
    %18 = arith.truncf %17 : vector<8x8xf32> to vector<8x8xbf16>
    %19 = vector.extract_strided_slice %12 {offsets = [0, 32], sizes = [8, 8], strides = [1, 1]} : vector<8x96xf32> to vector<8x8xf32>
    %20 = arith.truncf %19 : vector<8x8xf32> to vector<8x8xbf16>
    %21 = vector.extract_strided_slice %12 {offsets = [0, 64], sizes = [8, 8], strides = [1, 1]} : vector<8x96xf32> to vector<8x8xf32>
    %22 = arith.truncf %21 : vector<8x8xf32> to vector<8x8xbf16>
    %cst_12 = arith.constant dense<0.000000e+00> : vector<8x8xf32>
    %23 = tpu.matmul %18, %20, %cst_12 {dimension_numbers = #tpu.dot_dimension_numbers<[1], [1], [0], [0], [0, 0, 1, 0], [], []>} : vector<8x8xbf16>, vector<8x8xbf16>, vector<8x8xf32> -> vector<8x8xf32>
    %cst_13 = arith.constant 0.353553385 : f32
    %24 = vector.broadcast %cst_13 : f32 to vector<8x8xf32>
    %25 = arith.mulf %23, %24 : vector<8x8xf32>
    %26 = arith.addf %25, %16 : vector<8x8xf32>
    %cst_14 = arith.constant dense<0xFF800000> : vector<8xf32>
    %27 = vector.multi_reduction <maximumf>, %26, %cst_14 [1] : vector<8x8xf32> to vector<8xf32>
    %28 = vector.shape_cast %27 : vector<8xf32> to vector<8x1xf32>
    %29 = vector.broadcast %28 : vector<8x1xf32> to vector<8x8xf32>
    %30 = arith.subf %26, %29 : vector<8x8xf32>
    %31 = math.exp %30 : vector<8x8xf32>
    %cst_15 = arith.constant dense<0.000000e+00> : vector<8xf32>
    %32 = vector.multi_reduction <add>, %31, %cst_15 [1] : vector<8x8xf32> to vector<8xf32>
    %33 = vector.shape_cast %32 : vector<8xf32> to vector<8x1xf32>
    %34 = tpu.reciprocal %33 {approx = true} : vector<8x1xf32> -> vector<8x1xf32>
    %35 = vector.broadcast %34 : vector<8x1xf32> to vector<8x8xf32>
    %36 = arith.mulf %31, %35 : vector<8x8xf32>
    %37 = arith.truncf %36 : vector<8x8xf32> to vector<8x8xbf16>
    %cst_16 = arith.constant dense<0.000000e+00> : vector<8x8xf32>
    %38 = tpu.matmul %37, %22, %cst_16 {dimension_numbers = #tpu.dot_dimension_numbers<[1], [0], [0], [1], [0, 0, 1, 1], [], []>} : vector<8x8xbf16>, vector<8x8xbf16>, vector<8x8xf32> -> vector<8x8xf32>
    %c0_17 = arith.constant 0 : index
    %c0_18 = arith.constant 0 : index
    %39 = vector.load %arg17[%c0_17, %c0_18] : memref<8x32xf32, #tpu.memory_space<vmem>>, vector<8x8xf32>
    tpu.vector_store %arg17[%c0_17, %c0_18], %38 {strides = array<i32>} : memref<8x32xf32, #tpu.memory_space<vmem>>, vector<8x8xf32>,
    %40 = vector.extract_strided_slice %12 {offsets = [0, 8], sizes = [8, 8], strides = [1, 1]} : vector<8x96xf32> to vector<8x8xf32>
    %41 = arith.truncf %40 : vector<8x8xf32> to vector<8x8xbf16>
    %42 = vector.extract_strided_slice %12 {offsets = [0, 40], sizes = [8, 8], strides = [1, 1]} : vector<8x96xf32> to vector<8x8xf32>
    %43 = arith.truncf %42 : vector<8x8xf32> to vector<8x8xbf16>
    %44 = vector.extract_strided_slice %12 {offsets = [0, 72], sizes = [8, 8], strides = [1, 1]} : vector<8x96xf32> to vector<8x8xf32>
    %45 = arith.truncf %44 : vector<8x8xf32> to vector<8x8xbf16>
    %cst_19 = arith.constant dense<0.000000e+00> : vector<8x8xf32>
    %46 = tpu.matmul %41, %43, %cst_19 {dimension_numbers = #tpu.dot_dimension_numbers<[1], [1], [0], [0], [0, 0, 1, 0], [], []>} : vector<8x8xbf16>, vector<8x8xbf16>, vector<8x8xf32> -> vector<8x8xf32>
    %cst_20 = arith.constant 0.353553385 : f32
    %47 = vector.broadcast %cst_20 : f32 to vector<8x8xf32>
    %48 = arith.mulf %46, %47 : vector<8x8xf32>
    %49 = arith.addf %48, %16 : vector<8x8xf32>
    %cst_21 = arith.constant dense<0xFF800000> : vector<8xf32>
    %50 = vector.multi_reduction <maximumf>, %49, %cst_21 [1] : vector<8x8xf32> to vector<8xf32>
    %51 = vector.shape_cast %50 : vector<8xf32> to vector<8x1xf32>
    %52 = vector.broadcast %51 : vector<8x1xf32> to vector<8x8xf32>
    %53 = arith.subf %49, %52 : vector<8x8xf32>
    %54 = math.exp %53 : vector<8x8xf32>
    %cst_22 = arith.constant dense<0.000000e+00> : vector<8xf32>
    %55 = vector.multi_reduction <add>, %54, %cst_22 [1] : vector<8x8xf32> to vector<8xf32>
    %56 = vector.shape_cast %55 : vector<8xf32> to vector<8x1xf32>
    %57 = tpu.reciprocal %56 {approx = true} : vector<8x1xf32> -> vector<8x1xf32>
    %58 = vector.broadcast %57 : vector<8x1xf32> to vector<8x8xf32>
    %59 = arith.mulf %54, %58 : vector<8x8xf32>
    %60 = arith.truncf %59 : vector<8x8xf32> to vector<8x8xbf16>
    %cst_23 = arith.constant dense<0.000000e+00> : vector<8x8xf32>
    %61 = tpu.matmul %60, %45, %cst_23 {dimension_numbers = #tpu.dot_dimension_numbers<[1], [0], [0], [1], [0, 0, 1, 1], [], []>} : vector<8x8xbf16>, vector<8x8xbf16>, vector<8x8xf32> -> vector<8x8xf32>
    %c0_24 = arith.constant 0 : index
    %c8 = arith.constant 8 : index
    %62 = vector.load %arg17[%c0_24, %c8] : memref<8x32xf32, #tpu.memory_space<vmem>>, vector<8x8xf32>
    tpu.vector_store %arg17[%c0_24, %c8], %61 {strides = array<i32>} : memref<8x32xf32, #tpu.memory_space<vmem>>, vector<8x8xf32>,
    %63 = vector.extract_strided_slice %12 {offsets = [0, 16], sizes = [8, 8], strides = [1, 1]} : vector<8x96xf32> to vector<8x8xf32>
    %64 = arith.truncf %63 : vector<8x8xf32> to vector<8x8xbf16>
    %65 = vector.extract_strided_slice %12 {offsets = [0, 48], sizes = [8, 8], strides = [1, 1]} : vector<8x96xf32> to vector<8x8xf32>
    %66 = arith.truncf %65 : vector<8x8xf32> to vector<8x8xbf16>
    %67 = vector.extract_strided_slice %12 {offsets = [0, 80], sizes = [8, 8], strides = [1, 1]} : vector<8x96xf32> to vector<8x8xf32>
    %68 = arith.truncf %67 : vector<8x8xf32> to vector<8x8xbf16>
    %cst_25 = arith.constant dense<0.000000e+00> : vector<8x8xf32>
    %69 = tpu.matmul %64, %66, %cst_25 {dimension_numbers = #tpu.dot_dimension_numbers<[1], [1], [0], [0], [0, 0, 1, 0], [], []>} : vector<8x8xbf16>, vector<8x8xbf16>, vector<8x8xf32> -> vector<8x8xf32>
    %cst_26 = arith.constant 0.353553385 : f32
    %70 = vector.broadcast %cst_26 : f32 to vector<8x8xf32>
    %71 = arith.mulf %69, %70 : vector<8x8xf32>
    %72 = arith.addf %71, %16 : vector<8x8xf32>
    %cst_27 = arith.constant dense<0xFF800000> : vector<8xf32>
    %73 = vector.multi_reduction <maximumf>, %72, %cst_27 [1] : vector<8x8xf32> to vector<8xf32>
    %74 = vector.shape_cast %73 : vector<8xf32> to vector<8x1xf32>
    %75 = vector.broadcast %74 : vector<8x1xf32> to vector<8x8xf32>
    %76 = arith.subf %72, %75 : vector<8x8xf32>
    %77 = math.exp %76 : vector<8x8xf32>
    %cst_28 = arith.constant dense<0.000000e+00> : vector<8xf32>
    %78 = vector.multi_reduction <add>, %77, %cst_28 [1] : vector<8x8xf32> to vector<8xf32>
    %79 = vector.shape_cast %78 : vector<8xf32> to vector<8x1xf32>
    %80 = tpu.reciprocal %79 {approx = true} : vector<8x1xf32> -> vector<8x1xf32>
    %81 = vector.broadcast %80 : vector<8x1xf32> to vector<8x8xf32>
    %82 = arith.mulf %77, %81 : vector<8x8xf32>
    %83 = arith.truncf %82 : vector<8x8xf32> to vector<8x8xbf16>
    %cst_29 = arith.constant dense<0.000000e+00> : vector<8x8xf32>
    %84 = tpu.matmul %83, %68, %cst_29 {dimension_numbers = #tpu.dot_dimension_numbers<[1], [0], [0], [1], [0, 0, 1, 1], [], []>} : vector<8x8xbf16>, vector<8x8xbf16>, vector<8x8xf32> -> vector<8x8xf32>
    %c0_30 = arith.constant 0 : index
    %c16 = arith.constant 16 : index
    %85 = vector.load %arg17[%c0_30, %c16] : memref<8x32xf32, #tpu.memory_space<vmem>>, vector<8x8xf32>
    tpu.vector_store %arg17[%c0_30, %c16], %84 {strides = array<i32>} : memref<8x32xf32, #tpu.memory_space<vmem>>, vector<8x8xf32>,
    %86 = vector.extract_strided_slice %12 {offsets = [0, 24], sizes = [8, 8], strides = [1, 1]} : vector<8x96xf32> to vector<8x8xf32>
    %87 = arith.truncf %86 : vector<8x8xf32> to vector<8x8xbf16>
    %88 = vector.extract_strided_slice %12 {offsets = [0, 56], sizes = [8, 8], strides = [1, 1]} : vector<8x96xf32> to vector<8x8xf32>
    %89 = arith.truncf %88 : vector<8x8xf32> to vector<8x8xbf16>
    %90 = vector.extract_strided_slice %12 {offsets = [0, 88], sizes = [8, 8], strides = [1, 1]} : vector<8x96xf32> to vector<8x8xf32>
    %91 = arith.truncf %90 : vector<8x8xf32> to vector<8x8xbf16>
    %cst_31 = arith.constant dense<0.000000e+00> : vector<8x8xf32>
    %92 = tpu.matmul %87, %89, %cst_31 {dimension_numbers = #tpu.dot_dimension_numbers<[1], [1], [0], [0], [0, 0, 1, 0], [], []>} : vector<8x8xbf16>, vector<8x8xbf16>, vector<8x8xf32> -> vector<8x8xf32>
    %cst_32 = arith.constant 0.353553385 : f32
    %93 = vector.broadcast %cst_32 : f32 to vector<8x8xf32>
    %94 = arith.mulf %92, %93 : vector<8x8xf32>
    %95 = arith.addf %94, %16 : vector<8x8xf32>
    %cst_33 = arith.constant dense<0xFF800000> : vector<8xf32>
    %96 = vector.multi_reduction <maximumf>, %95, %cst_33 [1] : vector<8x8xf32> to vector<8xf32>
    %97 = vector.shape_cast %96 : vector<8xf32> to vector<8x1xf32>
    %98 = vector.broadcast %97 : vector<8x1xf32> to vector<8x8xf32>
    %99 = arith.subf %95, %98 : vector<8x8xf32>
    %100 = math.exp %99 : vector<8x8xf32>
    %cst_34 = arith.constant dense<0.000000e+00> : vector<8xf32>
    %101 = vector.multi_reduction <add>, %100, %cst_34 [1] : vector<8x8xf32> to vector<8xf32>
    %102 = vector.shape_cast %101 : vector<8xf32> to vector<8x1xf32>
    %103 = tpu.reciprocal %102 {approx = true} : vector<8x1xf32> -> vector<8x1xf32>
    %104 = vector.broadcast %103 : vector<8x1xf32> to vector<8x8xf32>
    %105 = arith.mulf %100, %104 : vector<8x8xf32>
    %106 = arith.truncf %105 : vector<8x8xf32> to vector<8x8xbf16>
    %cst_35 = arith.constant dense<0.000000e+00> : vector<8x8xf32>
    %107 = tpu.matmul %106, %91, %cst_35 {dimension_numbers = #tpu.dot_dimension_numbers<[1], [0], [0], [1], [0, 0, 1, 1], [], []>} : vector<8x8xbf16>, vector<8x8xbf16>, vector<8x8xf32> -> vector<8x8xf32>
    %c0_36 = arith.constant 0 : index
    %c24 = arith.constant 24 : index
    %108 = vector.load %arg17[%c0_36, %c24] : memref<8x32xf32, #tpu.memory_space<vmem>>, vector<8x8xf32>
    tpu.vector_store %arg17[%c0_36, %c24], %107 {strides = array<i32>} : memref<8x32xf32, #tpu.memory_space<vmem>>, vector<8x8xf32>,
    %c0_37 = arith.constant 0 : index
    %c0_38 = arith.constant 0 : index
    %109 = vector.load %arg17[%c0_37, %c0_38] : memref<8x32xf32, #tpu.memory_space<vmem>>, vector<8x32xf32>
    %110 = arith.truncf %109 : vector<8x32xf32> to vector<8x32xbf16>
    %c0_39 = arith.constant 0 : index
    %c0_40 = arith.constant 0 : index
    %c0_41 = arith.constant 0 : index
    %111 = vector.load %arg6[%c0_39, %c0_40, %c0_41] : memref<1x32x32xbf16, #tpu.memory_space<vmem>>, vector<1x32x32xbf16>
    %112 = vector.shape_cast %111 : vector<1x32x32xbf16> to vector<32x32xbf16>
    %cst_42 = arith.constant dense<0.000000e+00> : vector<8x32xf32>
    %113 = tpu.matmul %110, %112, %cst_42 {dimension_numbers = #tpu.dot_dimension_numbers<[1], [0], [0], [1], [0, 0, 1, 1], [], []>} : vector<8x32xbf16>, vector<32x32xbf16>, vector<8x32xf32> -> vector<8x32xf32>
    %c0_43 = arith.constant 0 : index
    %c0_44 = arith.constant 0 : index
    %c0_45 = arith.constant 0 : index
    %114 = vector.load %arg7[%c0_43, %c0_44, %c0_45] : memref<1x1x32xf32, #tpu.memory_space<vmem>>, vector<1x1x32xf32>
    %115 = vector.shape_cast %114 : vector<1x1x32xf32> to vector<1x32xf32>
    %116 = vector.broadcast %115 : vector<1x32xf32> to vector<8x32xf32>
    %117 = arith.addf %113, %116 : vector<8x32xf32>
    %118 = arith.addf %117, %4 : vector<8x32xf32>
    %c0_46 = arith.constant 0 : index
    %c0_47 = arith.constant 0 : index
    %c0_48 = arith.constant 0 : index
    %119 = vector.load %arg8[%c0_46, %c0_47, %c0_48] : memref<1x1x32xf32, #tpu.memory_space<vmem>>, vector<1x1x32xf32>
    %120 = vector.shape_cast %119 : vector<1x1x32xf32> to vector<1x32xf32>
    %c0_49 = arith.constant 0 : index
    %c0_50 = arith.constant 0 : index
    %c0_51 = arith.constant 0 : index
    %121 = vector.load %arg9[%c0_49, %c0_50, %c0_51] : memref<1x1x32xf32, #tpu.memory_space<vmem>>, vector<1x1x32xf32>
    %122 = vector.shape_cast %121 : vector<1x1x32xf32> to vector<1x32xf32>
    %cst_52 = arith.constant dense<0.000000e+00> : vector<8xf32>
    %123 = vector.multi_reduction <add>, %118, %cst_52 [1] : vector<8x32xf32> to vector<8xf32>
    %124 = vector.shape_cast %123 : vector<8xf32> to vector<8x1xf32>
    %cst_53 = arith.constant 3.200000e+01 : f32
    %125 = vector.broadcast %cst_53 : f32 to vector<8x1xf32>
    %126 = arith.divf %124, %125 : vector<8x1xf32>
    %127 = vector.broadcast %126 : vector<8x1xf32> to vector<8x32xf32>
    %128 = arith.subf %118, %127 : vector<8x32xf32>
    %129 = arith.mulf %128, %128 : vector<8x32xf32>
    %cst_54 = arith.constant dense<0.000000e+00> : vector<8xf32>
    %130 = vector.multi_reduction <add>, %129, %cst_54 [1] : vector<8x32xf32> to vector<8xf32>
    %131 = vector.shape_cast %130 : vector<8xf32> to vector<8x1xf32>
    %cst_55 = arith.constant 3.200000e+01 : f32
    %132 = vector.broadcast %cst_55 : f32 to vector<8x1xf32>
    %133 = arith.divf %131, %132 : vector<8x1xf32>
    %134 = vector.broadcast %126 : vector<8x1xf32> to vector<8x32xf32>
    %135 = arith.subf %118, %134 : vector<8x32xf32>
    %cst_56 = arith.constant 9.99999996E-13 : f32
    %136 = vector.broadcast %cst_56 : f32 to vector<8x1xf32>
    %137 = arith.addf %133, %136 : vector<8x1xf32>
    %138 = math.rsqrt %137 : vector<8x1xf32>
    %139 = vector.broadcast %138 : vector<8x1xf32> to vector<8x32xf32>
    %140 = arith.mulf %135, %139 : vector<8x32xf32>
    %141 = vector.broadcast %120 : vector<1x32xf32> to vector<8x32xf32>
    %142 = arith.mulf %140, %141 : vector<8x32xf32>
    %143 = vector.broadcast %122 : vector<1x32xf32> to vector<8x32xf32>
    %144 = arith.addf %142, %143 : vector<8x32xf32>
    %145 = arith.truncf %144 : vector<8x32xf32> to vector<8x32xbf16>
    %c0_57 = arith.constant 0 : index
    %c0_58 = arith.constant 0 : index
    %c0_59 = arith.constant 0 : index
    %146 = vector.load %arg10[%c0_57, %c0_58, %c0_59] : memref<1x32x64xbf16, #tpu.memory_space<vmem>>, vector<1x32x64xbf16>
    %147 = vector.shape_cast %146 : vector<1x32x64xbf16> to vector<32x64xbf16>
    %cst_60 = arith.constant dense<0.000000e+00> : vector<8x64xf32>
    %148 = tpu.matmul %145, %147, %cst_60 {dimension_numbers = #tpu.dot_dimension_numbers<[1], [0], [0], [1], [0, 0, 1, 1], [], []>} : vector<8x32xbf16>, vector<32x64xbf16>, vector<8x64xf32> -> vector<8x64xf32>
    %c0_61 = arith.constant 0 : index
    %c0_62 = arith.constant 0 : index
    %c0_63 = arith.constant 0 : index
    %149 = vector.load %arg11[%c0_61, %c0_62, %c0_63] : memref<1x1x64xf32, #tpu.memory_space<vmem>>, vector<1x1x64xf32>
    %150 = vector.shape_cast %149 : vector<1x1x64xf32> to vector<1x64xf32>
    %151 = vector.broadcast %150 : vector<1x64xf32> to vector<8x64xf32>
    %152 = arith.addf %148, %151 : vector<8x64xf32>
    %cst_64 = arith.constant 5.000000e-01 : f32
    %153 = vector.broadcast %cst_64 : f32 to vector<8x64xf32>
    %154 = arith.mulf %153, %152 : vector<8x64xf32>
    %cst_65 = arith.constant 4.471500e-02 : f32
    %155 = vector.broadcast %cst_65 : f32 to vector<8x64xf32>
    %156 = arith.mulf %155, %152 : vector<8x64xf32>
    %157 = arith.mulf %156, %152 : vector<8x64xf32>
    %158 = arith.mulf %157, %152 : vector<8x64xf32>
    %159 = arith.addf %152, %158 : vector<8x64xf32>
    %cst_66 = arith.constant 0.797884583 : f32
    %160 = vector.broadcast %cst_66 : f32 to vector<8x64xf32>
    %161 = arith.mulf %160, %159 : vector<8x64xf32>
    %162 = math.tanh %161 : vector<8x64xf32>
    %cst_67 = arith.constant 1.000000e+00 : f32
    %163 = vector.broadcast %cst_67 : f32 to vector<8x64xf32>
    %164 = arith.addf %163, %162 : vector<8x64xf32>
    %165 = arith.mulf %154, %164 : vector<8x64xf32>
    %166 = arith.truncf %165 : vector<8x64xf32> to vector<8x64xbf16>
    %c0_68 = arith.constant 0 : index
    %c0_69 = arith.constant 0 : index
    %c0_70 = arith.constant 0 : index
    %167 = vector.load %arg12[%c0_68, %c0_69, %c0_70] : memref<1x64x32xbf16, #tpu.memory_space<vmem>>, vector<1x64x32xbf16>
    %168 = vector.shape_cast %167 : vector<1x64x32xbf16> to vector<64x32xbf16>
    %cst_71 = arith.constant dense<0.000000e+00> : vector<8x32xf32>
    %169 = tpu.matmul %166, %168, %cst_71 {dimension_numbers = #tpu.dot_dimension_numbers<[1], [0], [0], [1], [0, 0, 1, 1], [], []>} : vector<8x64xbf16>, vector<64x32xbf16>, vector<8x32xf32> -> vector<8x32xf32>
    %c0_72 = arith.constant 0 : index
    %c0_73 = arith.constant 0 : index
    %c0_74 = arith.constant 0 : index
    %170 = vector.load %arg13[%c0_72, %c0_73, %c0_74] : memref<1x1x32xf32, #tpu.memory_space<vmem>>, vector<1x1x32xf32>
    %171 = vector.shape_cast %170 : vector<1x1x32xf32> to vector<1x32xf32>
    %172 = vector.broadcast %171 : vector<1x32xf32> to vector<8x32xf32>
    %173 = arith.addf %169, %172 : vector<8x32xf32>
    %174 = arith.addf %173, %144 : vector<8x32xf32>
    %c0_75 = arith.constant 0 : index
    %c0_76 = arith.constant 0 : index
    %c0_77 = arith.constant 0 : index
    %175 = vector.load %arg14[%c0_75, %c0_76, %c0_77] : memref<1x1x32xf32, #tpu.memory_space<vmem>>, vector<1x1x32xf32>
    %176 = vector.shape_cast %175 : vector<1x1x32xf32> to vector<1x32xf32>
    %c0_78 = arith.constant 0 : index
    %c0_79 = arith.constant 0 : index
    %c0_80 = arith.constant 0 : index
    %177 = vector.load %arg15[%c0_78, %c0_79, %c0_80] : memref<1x1x32xf32, #tpu.memory_space<vmem>>, vector<1x1x32xf32>
    %178 = vector.shape_cast %177 : vector<1x1x32xf32> to vector<1x32xf32>
    %cst_81 = arith.constant dense<0.000000e+00> : vector<8xf32>
    %179 = vector.multi_reduction <add>, %174, %cst_81 [1] : vector<8x32xf32> to vector<8xf32>
    %180 = vector.shape_cast %179 : vector<8xf32> to vector<8x1xf32>
    %cst_82 = arith.constant 3.200000e+01 : f32
    %181 = vector.broadcast %cst_82 : f32 to vector<8x1xf32>
    %182 = arith.divf %180, %181 : vector<8x1xf32>
    %183 = vector.broadcast %182 : vector<8x1xf32> to vector<8x32xf32>
    %184 = arith.subf %174, %183 : vector<8x32xf32>
    %185 = arith.mulf %184, %184 : vector<8x32xf32>
    %cst_83 = arith.constant dense<0.000000e+00> : vector<8xf32>
    %186 = vector.multi_reduction <add>, %185, %cst_83 [1] : vector<8x32xf32> to vector<8xf32>
    %187 = vector.shape_cast %186 : vector<8xf32> to vector<8x1xf32>
    %cst_84 = arith.constant 3.200000e+01 : f32
    %188 = vector.broadcast %cst_84 : f32 to vector<8x1xf32>
    %189 = arith.divf %187, %188 : vector<8x1xf32>
    %190 = vector.broadcast %182 : vector<8x1xf32> to vector<8x32xf32>
    %191 = arith.subf %174, %190 : vector<8x32xf32>
    %cst_85 = arith.constant 9.99999996E-13 : f32
    %192 = vector.broadcast %cst_85 : f32 to vector<8x1xf32>
    %193 = arith.addf %189, %192 : vector<8x1xf32>
    %194 = math.rsqrt %193 : vector<8x1xf32>
    %195 = vector.broadcast %194 : vector<8x1xf32> to vector<8x32xf32>
    %196 = arith.mulf %191, %195 : vector<8x32xf32>
    %197 = vector.broadcast %176 : vector<1x32xf32> to vector<8x32xf32>
    %198 = arith.mulf %196, %197 : vector<8x32xf32>
    %199 = vector.broadcast %178 : vector<1x32xf32> to vector<8x32xf32>
    %200 = arith.addf %198, %199 : vector<8x32xf32>
    %c0_86 = arith.constant 0 : index
    %c0_87 = arith.constant 0 : index
    %c0_88 = arith.constant 0 : index
    %201 = vector.load %arg16[%c0_86, %c0_87, %c0_88] : memref<1x8x32xf32, #tpu.memory_space<vmem>>, vector<1x8x32xf32>
    %202 = vector.shape_cast %201 : vector<1x8x32xf32> to vector<8x32xf32>
    %203 = vector.shape_cast %200 : vector<8x32xf32> to vector<1x8x32xf32>
    tpu.vector_store %arg16[%c0_86, %c0_87, %c0_88], %203 {strides = array<i32>} : memref<1x8x32xf32, #tpu.memory_space<vmem>>, vector<1x8x32xf32>,
    return
  }
  func.func @transform_0(%arg0: i32, %arg1: i32) -> (i32, i32, i32) {
    %c0_i32 = arith.constant 0 : i32
    %c0_i32_0 = arith.constant 0 : i32
    %c0_i32_1 = arith.constant 0 : i32
    return %arg0, %c0_i32, %c0_i32_0 : i32, i32, i32
  }
  func.func @transform_1(%arg0: i32, %arg1: i32) -> (i32, i32, i32) {
    %c0_i32 = arith.constant 0 : i32
    %c0_i32_0 = arith.constant 0 : i32
    %c0_i32_1 = arith.constant 0 : i32
    return %arg0, %c0_i32, %c0_i32_0 : i32, i32, i32
  }
  func.func @transform_2(%arg0: i32, %arg1: i32) -> (i32, i32, i32) {
    %c0_i32 = arith.constant 0 : i32
    %c0_i32_0 = arith.constant 0 : i32
    %c0_i32_1 = arith.constant 0 : i32
    return %arg1, %c0_i32, %c0_i32_0 : i32, i32, i32
  }
  func.func @transform_3(%arg0: i32, %arg1: i32) -> (i32, i32, i32) {
    %c0_i32 = arith.constant 0 : i32
    %c0_i32_0 = arith.constant 0 : i32
    %c0_i32_1 = arith.constant 0 : i32
    return %arg1, %c0_i32, %c0_i32_0 : i32, i32, i32
  }
  func.func @transform_4(%arg0: i32, %arg1: i32) -> (i32, i32, i32) {
    %c0_i32 = arith.constant 0 : i32
    %c0_i32_0 = arith.constant 0 : i32
    %c0_i32_1 = arith.constant 0 : i32
    return %arg1, %c0_i32, %c0_i32_0 : i32, i32, i32
  }
  func.func @transform_5(%arg0: i32, %arg1: i32) -> (i32, i32, i32) {
    %c0_i32 = arith.constant 0 : i32
    %c0_i32_0 = arith.constant 0 : i32
    %c0_i32_1 = arith.constant 0 : i32
    return %arg1, %c0_i32, %c0_i32_0 : i32, i32, i32
  }
  func.func @transform_6(%arg0: i32, %arg1: i32) -> (i32, i32, i32) {
    %c0_i32 = arith.constant 0 : i32
    %c0_i32_0 = arith.constant 0 : i32
    %c0_i32_1 = arith.constant 0 : i32
    return %arg1, %c0_i32, %c0_i32_0 : i32, i32, i32
  }
  func.func @transform_7(%arg0: i32, %arg1: i32) -> (i32, i32, i32) {
    %c0_i32 = arith.constant 0 : i32
    %c0_i32_0 = arith.constant 0 : i32
    %c0_i32_1 = arith.constant 0 : i32
    return %arg1, %c0_i32, %c0_i32_0 : i32, i32, i32
  }
  func.func @transform_8(%arg0: i32, %arg1: i32) -> (i32, i32, i32) {
    %c0_i32 = arith.constant 0 : i32
    %c0_i32_0 = arith.constant 0 : i32
    %c0_i32_1 = arith.constant 0 : i32
    return %arg1, %c0_i32, %c0_i32_0 : i32, i32, i32
  }
  func.func @transform_9(%arg0: i32, %arg1: i32) -> (i32, i32, i32) {
    %c0_i32 = arith.constant 0 : i32
    %c0_i32_0 = arith.constant 0 : i32
    %c0_i32_1 = arith.constant 0 : i32
    return %arg1, %c0_i32, %c0_i32_0 : i32, i32, i32
  }
  func.func @transform_10(%arg0: i32, %arg1: i32) -> (i32, i32, i32) {
    %c0_i32 = arith.constant 0 : i32
    %c0_i32_0 = arith.constant 0 : i32
    %c0_i32_1 = arith.constant 0 : i32
    return %arg1, %c0_i32, %c0_i32_0 : i32, i32, i32
  }
  func.func @transform_11(%arg0: i32, %arg1: i32) -> (i32, i32, i32) {
    %c0_i32 = arith.constant 0 : i32
    %c0_i32_0 = arith.constant 0 : i32
    %c0_i32_1 = arith.constant 0 : i32
    return %arg1, %c0_i32, %c0_i32_0 : i32, i32, i32
  }
  func.func @transform_12(%arg0: i32, %arg1: i32) -> (i32, i32, i32) {
    %c0_i32 = arith.constant 0 : i32
    %c0_i32_0 = arith.constant 0 : i32
    %c0_i32_1 = arith.constant 0 : i32
    return %arg1, %c0_i32, %c0_i32_0 : i32, i32, i32
  }
  func.func @transform_13(%arg0: i32, %arg1: i32) -> (i32, i32, i32) {
    %c0_i32 = arith.constant 0 : i32
    %c0_i32_0 = arith.constant 0 : i32
    %c0_i32_1 = arith.constant 0 : i32
    return %arg1, %c0_i32, %c0_i32_0 : i32, i32, i32
  }
  func.func @transform_14(%arg0: i32, %arg1: i32) -> (i32, i32, i32) {
    %c0_i32 = arith.constant 0 : i32
    %c0_i32_0 = arith.constant 0 : i32
    %c0_i32_1 = arith.constant 0 : i32
    return %arg0, %c0_i32, %c0_i32_0 : i32, i32, i32
  }
}

</mosaic_0001>

<llo_original>
// kernel: bert_multitask_forward.3
$region0: #{bert_multitask_forward.3}
  #allocation0 [shape = 'u32[]', space=smem, size = 0x4, offset = 0x4, fixed_abs, tag = 'smem constant byte address 0x4 - core index']
  #allocation1 [shape = 'u32[144,128]{1,0:T(1,128)}', space=vmem, size = 0x12000, scoped, tag = 'internal scratch']
  %s0 = inlined_call_operand.vmem [shape: bf16[2,8,32], index: 0, kind: input, shape index: {}]
  %s1 = inlined_call_operand.vmem [shape: f32[8,32], index: 1, kind: input, shape index: {}]
  %s2 = inlined_call_operand.vmem [shape: f32[1,32], index: 2, kind: input, shape index: {}]
  %s3 = inlined_call_operand.vmem [shape: f32[1,32], index: 3, kind: input, shape index: {}]
  %s4 = inlined_call_operand.vmem [shape: f32[2,8,32], index: 4, kind: output, shape index: {}]
  %s5 = sld [smem:[#allocation0]]
  $region49: #{bert_multitask_forward.3} parent=0
    _
  %s7 = ssub.s32 1, %s5
  %s8 = scalar_select 0, %s7, %s5
  loop: start=0, step=1, limit=4
  $region2: #{bert_multitask_forward.3} parent=0 // loop_pre_header
    _
  $region3: #{bert_multitask_forward.3} parent=0 // loop_header
    %s10 = sphi 0, %s14
    %p11 = scmp.ge.s32.totalorder %s10, 4
    %s20 = sphi 0, %s22
    %s23 = sphi 0, %s20
    %s24 = sphi 0, %s23
    %s40 = sphi 0, %s24
    %s44 = sphi 0, %s44
    %s46 = sphi 0, %s44
    %s47 = sphi 0, %s46
    %s61 = sphi 0, %s47
    %s65 = sphi 0, %s65
    %s67 = sphi 0, %s65
    %s68 = sphi 0, %s67
    %s82 = sphi 0, %s68
    %s86 = sphi 0, %s86
    %s88 = sphi 0, %s86
    %s89 = sphi 0, %s88
    %s103 = sphi 0, %s89
    %s109 = sphi 0, %s111
    %s112 = sphi 0, %s109
    %s113 = sphi 0, %s112
    %s129 = sphi 0, %s113
  $region4: #{bert_multitask_forward.3} parent=0 // loop_header_branch
    %13 = sbr.rel (%p11) target = $region8
  $region5: #{bert_multitask_forward.3} parent=0 // loop_body
    %s15 = ssub.s32 %s10, 1
    %s16 = ssub.s32 %s10, 2
    %s17 = sadd.s32 %s10, 1
    %s18 = ssub.s32 %s10, %s17
    %p19 = scmp.eq.s32.totalorder %s18, 0
    %s21 = sadd.s32 %s20, 1
    %s22 = scalar_select %p19, %s20, %s21
    %p25 = pneg %p19
    %p26 = scmp.eq.s32.totalorder %s10, 1
    %p27 = por %p25, %p26
    %p28 = scmp.ne.s32.totalorder %s20, %s23
    %p29 = scmp.eq.s32.totalorder %s10, 0
    %p30 = por %p28, %p29
    %p31 = scmp.ne.s32.totalorder %s20, %s23
    %p32 = scmp.eq.s32.totalorder %s15, 1
    %p33 = por %p31, %p32
    %p34 = scmp.ne.s32.totalorder %s23, %s24
    %p35 = scmp.eq.s32.totalorder %s15, 0
    %p36 = por %p34, %p35
    %p37 = scmp.ne.s32.totalorder %s23, %s24
    %p38 = scmp.eq.s32.totalorder %s16, 1
    %p39 = por %p37, %p38
    %p41 = scmp.ne.s32.totalorder %s24, %s40
    %p42 = scmp.eq.s32.totalorder %s16, 0
    %p43 = por %p41, %p42
    %s45 = sadd.s32 %s44, 1
    %p48 = scmp.eq.s32.totalorder %s10, 1
    %p49 = scmp.ne.s32.totalorder %s44, %s46
    %p50 = scmp.eq.s32.totalorder %s10, 0
    %p51 = por %p49, %p50
    %p52 = scmp.ne.s32.totalorder %s44, %s46
    %p53 = scmp.eq.s32.totalorder %s15, 1
    %p54 = por %p52, %p53
    %p55 = scmp.ne.s32.totalorder %s46, %s47
    %p56 = scmp.eq.s32.totalorder %s15, 0
    %p57 = por %p55, %p56
    %p58 = scmp.ne.s32.totalorder %s46, %s47
    %p59 = scmp.eq.s32.totalorder %s16, 1
    %p60 = por %p58, %p59
    %p62 = scmp.ne.s32.totalorder %s47, %s61
    %p63 = scmp.eq.s32.totalorder %s16, 0
    %p64 = por %p62, %p63
    %s66 = sadd.s32 %s65, 1
    %p69 = scmp.eq.s32.totalorder %s10, 1
    %p70 = scmp.ne.s32.totalorder %s65, %s67
    %p71 = scmp.eq.s32.totalorder %s10, 0
    %p72 = por %p70, %p71
    %p73 = scmp.ne.s32.totalorder %s65, %s67
    %p74 = scmp.eq.s32.totalorder %s15, 1
    %p75 = por %p73, %p74
    %p76 = scmp.ne.s32.totalorder %s67, %s68
    %p77 = scmp.eq.s32.totalorder %s15, 0
    %p78 = por %p76, %p77
    %p79 = scmp.ne.s32.totalorder %s67, %s68
    %p80 = scmp.eq.s32.totalorder %s16, 1
    %p81 = por %p79, %p80
    %p83 = scmp.ne.s32.totalorder %s68, %s82
    %p84 = scmp.eq.s32.totalorder %s16, 0
    %p85 = por %p83, %p84
    %s87 = sadd.s32 %s86, 1
    %p90 = scmp.eq.s32.totalorder %s10, 1
    %p91 = scmp.ne.s32.totalorder %s86, %s88
    %p92 = scmp.eq.s32.totalorder %s10, 0
    %p93 = por %p91, %p92
    %p94 = scmp.ne.s32.totalorder %s86, %s88
    %p95 = scmp.eq.s32.totalorder %s15, 1
    %p96 = por %p94, %p95
    %p97 = scmp.ne.s32.totalorder %s88, %s89
    %p98 = scmp.eq.s32.totalorder %s15, 0
    %p99 = por %p97, %p98
    %p100 = scmp.ne.s32.totalorder %s88, %s89
    %p101 = scmp.eq.s32.totalorder %s16, 1
    %p102 = por %p100, %p101
    %p104 = scmp.ne.s32.totalorder %s89, %s103
    %p105 = scmp.eq.s32.totalorder %s16, 0
    %p106 = por %p104, %p105
    %s107 = ssub.s32 %s10, %s17
    %p108 = scmp.eq.s32.totalorder %s107, 0
    %s110 = sadd.s32 %s109, 1
    %s111 = scalar_select %p108, %s109, %s110
    %p114 = pneg %p108
    %p115 = scmp.eq.s32.totalorder %s10, 1
    %p116 = por %p114, %p115
    %p117 = scmp.ne.s32.totalorder %s109, %s112
    %p118 = scmp.eq.s32.totalorder %s10, 0
    %p119 = por %p117, %p118
    %p120 = scmp.ne.s32.totalorder %s109, %s112
    %p121 = scmp.eq.s32.totalorder %s15, 1
    %p122 = por %p120, %p121
    %p123 = scmp.ne.s32.totalorder %s112, %s113
    %p124 = scmp.eq.s32.totalorder %s15, 0
    %p125 = por %p123, %p124
    %p126 = scmp.ne.s32.totalorder %s112, %s113
    %p127 = scmp.eq.s32.totalorder %s16, 1
    %p128 = por %p126, %p127
    %p130 = scmp.ne.s32.totalorder %s113, %s129
    %p131 = scmp.eq.s32.totalorder %s16, 0
    %p132 = por %p130, %p131
    %p133 = scmp.le.s32.totalorder 1, %s10
    %p134 = scmp.lt.s32.totalorder %s10, 3
    %p135 = pnand %p133, %p134
    %p136 = pneg %p135
    // Predicated region
    $region9: #{bert_multitask_forward.3} parent=5 // pred_check
      _
    $region10: #{bert_multitask_forward.3} parent=5 // pred_check_branch
      %138 = sbr.rel (%p135) target = $region12
    $region11: #{bert_multitask_forward.3} parent=5 // pred_region
      %s139 = ssub.s32 %s10, 1
      // Predicated region
      $region13: #{bert_multitask_forward.3} parent=11 // pred_check
        %p140 = pneg %p57
      $region14: #{bert_multitask_forward.3} parent=11 // pred_check_branch
        %142 = sbr.rel (%p140) target = $region16
      $region15: #{bert_multitask_forward.3} parent=11 // pred_region
        _
      $region16: #{bert_multitask_forward.3} parent=11 // pred_fallthru
        _
      // Predicated region
      $region17: #{bert_multitask_forward.3} parent=11 // pred_check
        %p143 = pneg %p78
      $region18: #{bert_multitask_forward.3} parent=11 // pred_check_branch
        %145 = sbr.rel (%p143) target = $region20
      $region19: #{bert_multitask_forward.3} parent=11 // pred_region
        _
      $region20: #{bert_multitask_forward.3} parent=11 // pred_fallthru
        _
      // Predicated region
      $region21: #{bert_multitask_forward.3} parent=11 // pred_check
        %p146 = pneg %p99
      $region22: #{bert_multitask_forward.3} parent=11 // pred_check_branch
        %148 = sbr.rel (%p146) target = $region24
      $region23: #{bert_multitask_forward.3} parent=11 // pred_region
        _
      $region24: #{bert_multitask_forward.3} parent=11 // pred_fallthru
        _
    $region12: #{bert_multitask_forward.3} parent=5 // pred_fallthru
      _
    %p149 = scmp.lt.s32.totalorder %s10, 2
    // Predicated region
    $region25: #{bert_multitask_forward.3} parent=5 // pred_check
      %p150 = pneg %p149
    $region26: #{bert_multitask_forward.3} parent=5 // pred_check_branch
      %152 = sbr.rel (%p150) target = $region28
    $region27: #{bert_multitask_forward.3} parent=5 // pred_region
      // Predicated region
      $region29: #{bert_multitask_forward.3} parent=27 // pred_check
        %p153 = pneg %p30
      $region30: #{bert_multitask_forward.3} parent=27 // pred_check_branch
        %155 = sbr.rel (%p153) target = $region32
      $region31: #{bert_multitask_forward.3} parent=27 // pred_region
        %p156 = scmp.lt.s32.totalorder %s10, 1
        %s157 = scalar_select %p156, %s10, 1
        %s158 = smul.addr %s157, 4
        %s159 = scalar_lea.vmem %s0, %s158
      $region32: #{bert_multitask_forward.3} parent=27 // pred_fallthru
        _
    $region28: #{bert_multitask_forward.3} parent=5 // pred_fallthru
      _
    %p160 = scmp.le.s32.totalorder 1, %s10
    %p161 = scmp.lt.s32.totalorder %s10, 3
    %p162 = pnand %p160, %p161
    %p163 = pneg %p162
    // Predicated region
    $region33: #{bert_multitask_forward.3} parent=5 // pred_check
      _
    $region34: #{bert_multitask_forward.3} parent=5 // pred_check_branch
      %165 = sbr.rel (%p162) target = $region36
    $region35: #{bert_multitask_forward.3} parent=5 // pred_region
      %s166 = ssub.s32 %s10, 1
      %p167 = scmp.lt.s32.totalorder %s15, 1
      %s168 = scalar_select %p167, %s15, 1
      %s169 = smul.addr %s168, 4
      %s170 = scalar_lea.vmem %s0, %s169
      %p171 = pneg %p36
      %p172 = pneg %p33
      %p173 = pneg %p57
      %p174 = pneg %p54
      %p175 = pneg %p78
      %p176 = pneg %p75
      %p177 = pneg %p99
      %p178 = pneg %p96
      %p179 = pneg %p125
      %p180 = pneg %p122
      %p181 = scmp.lt.s32.totalorder %s15, 1
      %s182 = scalar_select %p181, %s15, 1
      %s183 = smul.addr %s182, 8
      %s184 = scalar_lea.vmem %s4, %s183
      %p185 = scmp.lt.s32.totalorder %s15, 1
      %s186 = scalar_select %p185, %s15, 1
      %s187 = smul.addr %s186, 4
      %s188 = scalar_lea.vmem %s0, %s187
      %p189 = scmp.lt.s32.totalorder %s15, 1
      %s190 = scalar_select %p189, %s15, 1
      %s191 = smul.addr %s190, 8
      %s192 = scalar_lea.vmem %s4, %s191
      %v193 = vld [vmem:[%s188] sm:$0xf]
      %v194 = vunpack.c.l.bf16 %v193
      %v195 = vld [vmem:[%s1] sm:$0xff]
      %v196 = vadd.f32 %v194, %v195
      %v197 = vld [vmem:[%s2] sm:$0x1]
      %v198 = vld [vmem:[%s3] sm:$0x1]
      %vm199 = vcmask 261120
      %v200 = vsel %vm199, %v196, 0.0
      %201 = vadd.xlane.f32.xlu0 %v200
      %v202 = vpop.xlane.xlu0 %201
      %v203 = vrcp.pop 32.0
      %v204 = vmul.f32 %v202, %v203
      %v205 = vsub.f32 %v196, %v204
      %v206 = vmul.f32 %v205, %v205
      %v207 = vsel %vm199, %v206, 0.0
      %208 = vadd.xlane.f32.xlu0 %v207
      %v209 = vpop.xlane.xlu0 %208
      %v210 = vmul.f32 %v209, %v203
      %v211 = vadd.f32 %v210, 1e-12
      %v212 = vrsqrt.pop %v211
      %v213 = vmul.f32 %v205, %v212
      %v215 = vlaneseq
      %v216 = vshrl.u32 %v215, 7
      %v217 = vsub.s32 0, %v216
      %v218 = vrot.slane %v197, %v217
      %v220 = vmul.f32 %v213, %v218
      %v222 = vlaneseq
      %v223 = vshrl.u32 %v222, 7
      %v224 = vsub.s32 0, %v223
      %v225 = vrot.slane %v198, %v224
      %v227 = vadd.f32 %v220, %v225
      %228 = vst.msk [vmem:[%s192] sm:$0xff] %vm199, %v227
      %p229 = scmp.lt.s32.totalorder %s15, 1
      %s230 = scalar_select %p229, %s15, 1
      %s231 = smul.addr %s230, 8
      %s232 = scalar_lea.vmem %s4, %s231
      // Predicated region
      $region37: #{bert_multitask_forward.3} parent=35 // pred_check
        %p233 = pneg %p122
      $region38: #{bert_multitask_forward.3} parent=35 // pred_check_branch
        %235 = sbr.rel (%p233) target = $region40
      $region39: #{bert_multitask_forward.3} parent=35 // pred_region
        _
      $region40: #{bert_multitask_forward.3} parent=35 // pred_fallthru
        _
    $region36: #{bert_multitask_forward.3} parent=5 // pred_fallthru
      _
    %p236 = scmp.le.s32.totalorder 2, %s10
    // Predicated region
    $region41: #{bert_multitask_forward.3} parent=5 // pred_check
      %p237 = pneg %p236
    $region42: #{bert_multitask_forward.3} parent=5 // pred_check_branch
      %239 = sbr.rel (%p237) target = $region44
    $region43: #{bert_multitask_forward.3} parent=5 // pred_region
      %s240 = ssub.s32 %s10, 2
      // Predicated region
      $region45: #{bert_multitask_forward.3} parent=43 // pred_check
        %p241 = pneg %p128
      $region46: #{bert_multitask_forward.3} parent=43 // pred_check_branch
        %243 = sbr.rel (%p241) target = $region48
      $region47: #{bert_multitask_forward.3} parent=43 // pred_region
        %p244 = scmp.lt.s32.totalorder %s16, 1
        %s245 = scalar_select %p244, %s16, 1
        %s246 = smul.addr %s245, 8
        %s247 = scalar_lea.vmem %s4, %s246
      $region48: #{bert_multitask_forward.3} parent=43 // pred_fallthru
        _
    $region44: #{bert_multitask_forward.3} parent=5 // pred_fallthru
      _
  $region6: #{bert_multitask_forward.3} parent=0 // loop_footer
    %s14 = sadd.s32 1, %s10
  $region7: #{bert_multitask_forward.3} parent=0 // loop_footer_branch
    %9 = sbr.rel target = $region3
  $region8: #{bert_multitask_forward.3} parent=0 // loop_exit
    _

// kernel: bert_multitask_forward.5
$region0: #{bert_multitask_forward.5}
  #allocation0 [shape = 'u32[]', space=smem, size = 0x4, offset = 0x4, fixed_abs, tag = 'smem constant byte address 0x4 - core index']
  #allocation1 [shape = 'u32[144,128]{1,0:T(1,128)}', space=vmem, size = 0x12000, scoped, tag = 'internal scratch']
  %s0 = inlined_call_operand.vmem [shape: f32[2,1,8], index: 0, kind: input, shape index: {}]
  %s1 = inlined_call_operand.vmem [shape: f32[2,8,32], index: 1, kind: input, shape index: {}]
  %s2 = inlined_call_operand.vmem [shape: bf16[32,128], index: 2, kind: input, shape index: {}]
  %s3 = inlined_call_operand.vmem [shape: f32[1,128], index: 3, kind: input, shape index: {}]
  %s4 = inlined_call_operand.vmem [shape: f32[2,1,128], index: 4, kind: output, shape index: {}]
  %s5 = sld [smem:[#allocation0]]
  $region49: #{bert_multitask_forward.5} parent=0
    _
  %s7 = ssub.s32 1, %s5
  %s8 = scalar_select 0, %s7, %s5
  loop: start=0, step=1, limit=4
  $region2: #{bert_multitask_forward.5} parent=0 // loop_pre_header
    _
  $region3: #{bert_multitask_forward.5} parent=0 // loop_header
    %s10 = sphi 0, %s14
    %p11 = scmp.ge.s32.totalorder %s10, 4
    %s20 = sphi 0, %s22
    %s23 = sphi 0, %s20
    %s24 = sphi 0, %s23
    %s40 = sphi 0, %s24
    %s46 = sphi 0, %s48
    %s49 = sphi 0, %s46
    %s50 = sphi 0, %s49
    %s66 = sphi 0, %s50
    %s70 = sphi 0, %s70
    %s72 = sphi 0, %s70
    %s73 = sphi 0, %s72
    %s87 = sphi 0, %s73
    %s91 = sphi 0, %s91
    %s93 = sphi 0, %s91
    %s94 = sphi 0, %s93
    %s108 = sphi 0, %s94
    %s114 = sphi 0, %s116
    %s117 = sphi 0, %s114
    %s118 = sphi 0, %s117
    %s134 = sphi 0, %s118
  $region4: #{bert_multitask_forward.5} parent=0 // loop_header_branch
    %13 = sbr.rel (%p11) target = $region8
  $region5: #{bert_multitask_forward.5} parent=0 // loop_body
    %s15 = ssub.s32 %s10, 1
    %s16 = ssub.s32 %s10, 2
    %s17 = sadd.s32 %s10, 1
    %s18 = ssub.s32 %s10, %s17
    %p19 = scmp.eq.s32.totalorder %s18, 0
    %s21 = sadd.s32 %s20, 1
    %s22 = scalar_select %p19, %s20, %s21
    %p25 = pneg %p19
    %p26 = scmp.eq.s32.totalorder %s10, 1
    %p27 = por %p25, %p26
    %p28 = scmp.ne.s32.totalorder %s20, %s23
    %p29 = scmp.eq.s32.totalorder %s10, 0
    %p30 = por %p28, %p29
    %p31 = scmp.ne.s32.totalorder %s20, %s23
    %p32 = scmp.eq.s32.totalorder %s15, 1
    %p33 = por %p31, %p32
    %p34 = scmp.ne.s32.totalorder %s23, %s24
    %p35 = scmp.eq.s32.totalorder %s15, 0
    %p36 = por %p34, %p35
    %p37 = scmp.ne.s32.totalorder %s23, %s24
    %p38 = scmp.eq.s32.totalorder %s16, 1
    %p39 = por %p37, %p38
    %p41 = scmp.ne.s32.totalorder %s24, %s40
    %p42 = scmp.eq.s32.totalorder %s16, 0
    %p43 = por %p41, %p42
    %s44 = ssub.s32 %s10, %s17
    %p45 = scmp.eq.s32.totalorder %s44, 0
    %s47 = sadd.s32 %s46, 1
    %s48 = scalar_select %p45, %s46, %s47
    %p51 = pneg %p45
    %p52 = scmp.eq.s32.totalorder %s10, 1
    %p53 = por %p51, %p52
    %p54 = scmp.ne.s32.totalorder %s46, %s49
    %p55 = scmp.eq.s32.totalorder %s10, 0
    %p56 = por %p54, %p55
    %p57 = scmp.ne.s32.totalorder %s46, %s49
    %p58 = scmp.eq.s32.totalorder %s15, 1
    %p59 = por %p57, %p58
    %p60 = scmp.ne.s32.totalorder %s49, %s50
    %p61 = scmp.eq.s32.totalorder %s15, 0
    %p62 = por %p60, %p61
    %p63 = scmp.ne.s32.totalorder %s49, %s50
    %p64 = scmp.eq.s32.totalorder %s16, 1
    %p65 = por %p63, %p64
    %p67 = scmp.ne.s32.totalorder %s50, %s66
    %p68 = scmp.eq.s32.totalorder %s16, 0
    %p69 = por %p67, %p68
    %s71 = sadd.s32 %s70, 1
    %p74 = scmp.eq.s32.totalorder %s10, 1
    %p75 = scmp.ne.s32.totalorder %s70, %s72
    %p76 = scmp.eq.s32.totalorder %s10, 0
    %p77 = por %p75, %p76
    %p78 = scmp.ne.s32.totalorder %s70, %s72
    %p79 = scmp.eq.s32.totalorder %s15, 1
    %p80 = por %p78, %p79
    %p81 = scmp.ne.s32.totalorder %s72, %s73
    %p82 = scmp.eq.s32.totalorder %s15, 0
    %p83 = por %p81, %p82
    %p84 = scmp.ne.s32.totalorder %s72, %s73
    %p85 = scmp.eq.s32.totalorder %s16, 1
    %p86 = por %p84, %p85
    %p88 = scmp.ne.s32.totalorder %s73, %s87
    %p89 = scmp.eq.s32.totalorder %s16, 0
    %p90 = por %p88, %p89
    %s92 = sadd.s32 %s91, 1
    %p95 = scmp.eq.s32.totalorder %s10, 1
    %p96 = scmp.ne.s32.totalorder %s91, %s93
    %p97 = scmp.eq.s32.totalorder %s10, 0
    %p98 = por %p96, %p97
    %p99 = scmp.ne.s32.totalorder %s91, %s93
    %p100 = scmp.eq.s32.totalorder %s15, 1
    %p101 = por %p99, %p100
    %p102 = scmp.ne.s32.totalorder %s93, %s94
    %p103 = scmp.eq.s32.totalorder %s15, 0
    %p104 = por %p102, %p103
    %p105 = scmp.ne.s32.totalorder %s93, %s94
    %p106 = scmp.eq.s32.totalorder %s16, 1
    %p107 = por %p105, %p106
    %p109 = scmp.ne.s32.totalorder %s94, %s108
    %p110 = scmp.eq.s32.totalorder %s16, 0
    %p111 = por %p109, %p110
    %s112 = ssub.s32 %s10, %s17
    %p113 = scmp.eq.s32.totalorder %s112, 0
    %s115 = sadd.s32 %s114, 1
    %s116 = scalar_select %p113, %s114, %s115
    %p119 = pneg %p113
    %p120 = scmp.eq.s32.totalorder %s10, 1
    %p121 = por %p119, %p120
    %p122 = scmp.ne.s32.totalorder %s114, %s117
    %p123 = scmp.eq.s32.totalorder %s10, 0
    %p124 = por %p122, %p123
    %p125 = scmp.ne.s32.totalorder %s114, %s117
    %p126 = scmp.eq.s32.totalorder %s15, 1
    %p127 = por %p125, %p126
    %p128 = scmp.ne.s32.totalorder %s117, %s118
    %p129 = scmp.eq.s32.totalorder %s15, 0
    %p130 = por %p128, %p129
    %p131 = scmp.ne.s32.totalorder %s117, %s118
    %p132 = scmp.eq.s32.totalorder %s16, 1
    %p133 = por %p131, %p132
    %p135 = scmp.ne.s32.totalorder %s118, %s134
    %p136 = scmp.eq.s32.totalorder %s16, 0
    %p137 = por %p135, %p136
    %p138 = scmp.le.s32.totalorder 1, %s10
    %p139 = scmp.lt.s32.totalorder %s10, 3
    %p140 = pnand %p138, %p139
    %p141 = pneg %p140
    // Predicated region
    $region9: #{bert_multitask_forward.5} parent=5 // pred_check
      _
    $region10: #{bert_multitask_forward.5} parent=5 // pred_check_branch
      %143 = sbr.rel (%p140) target = $region12
    $region11: #{bert_multitask_forward.5} parent=5 // pred_region
      %s144 = ssub.s32 %s10, 1
      // Predicated region
      $region13: #{bert_multitask_forward.5} parent=11 // pred_check
        %p145 = pneg %p83
      $region14: #{bert_multitask_forward.5} parent=11 // pred_check_branch
        %147 = sbr.rel (%p145) target = $region16
      $region15: #{bert_multitask_forward.5} parent=11 // pred_region
        _
      $region16: #{bert_multitask_forward.5} parent=11 // pred_fallthru
        _
      // Predicated region
      $region17: #{bert_multitask_forward.5} parent=11 // pred_check
        %p148 = pneg %p104
      $region18: #{bert_multitask_forward.5} parent=11 // pred_check_branch
        %150 = sbr.rel (%p148) target = $region20
      $region19: #{bert_multitask_forward.5} parent=11 // pred_region
        _
      $region20: #{bert_multitask_forward.5} parent=11 // pred_fallthru
        _
    $region12: #{bert_multitask_forward.5} parent=5 // pred_fallthru
      _
    %p151 = scmp.lt.s32.totalorder %s10, 2
    // Predicated region
    $region21: #{bert_multitask_forward.5} parent=5 // pred_check
      %p152 = pneg %p151
    $region22: #{bert_multitask_forward.5} parent=5 // pred_check_branch
      %154 = sbr.rel (%p152) target = $region24
    $region23: #{bert_multitask_forward.5} parent=5 // pred_region
      // Predicated region
      $region25: #{bert_multitask_forward.5} parent=23 // pred_check
        %p155 = pneg %p30
      $region26: #{bert_multitask_forward.5} parent=23 // pred_check_branch
        %157 = sbr.rel (%p155) target = $region28
      $region27: #{bert_multitask_forward.5} parent=23 // pred_region
        %p158 = scmp.lt.s32.totalorder %s10, 1
        %s159 = scalar_select %p158, %s10, 1
        %s160 = scalar_lea.vmem %s0, %s159
      $region28: #{bert_multitask_forward.5} parent=23 // pred_fallthru
        _
      // Predicated region
      $region29: #{bert_multitask_forward.5} parent=23 // pred_check
        %p161 = pneg %p56
      $region30: #{bert_multitask_forward.5} parent=23 // pred_check_branch
        %163 = sbr.rel (%p161) target = $region32
      $region31: #{bert_multitask_forward.5} parent=23 // pred_region
        %p164 = scmp.lt.s32.totalorder %s10, 1
        %s165 = scalar_select %p164, %s10, 1
        %s166 = smul.addr %s165, 8
        %s167 = scalar_lea.vmem %s1, %s166
      $region32: #{bert_multitask_forward.5} parent=23 // pred_fallthru
        _
    $region24: #{bert_multitask_forward.5} parent=5 // pred_fallthru
      _
    %p168 = scmp.le.s32.totalorder 1, %s10
    %p169 = scmp.lt.s32.totalorder %s10, 3
    %p170 = pnand %p168, %p169
    %p171 = pneg %p170
    // Predicated region
    $region33: #{bert_multitask_forward.5} parent=5 // pred_check
      _
    $region34: #{bert_multitask_forward.5} parent=5 // pred_check_branch
      %173 = sbr.rel (%p170) target = $region36
    $region35: #{bert_multitask_forward.5} parent=5 // pred_region
      %s174 = ssub.s32 %s10, 1
      %p175 = scmp.lt.s32.totalorder %s15, 1
      %s176 = scalar_select %p175, %s15, 1
      %s177 = scalar_lea.vmem %s0, %s176
      %p178 = pneg %p36
      %p179 = pneg %p33
      %p180 = scmp.lt.s32.totalorder %s15, 1
      %s181 = scalar_select %p180, %s15, 1
      %s182 = smul.addr %s181, 8
      %s183 = scalar_lea.vmem %s1, %s182
      %p184 = pneg %p62
      %p185 = pneg %p59
      %p186 = pneg %p83
      %p187 = pneg %p80
      %p188 = pneg %p104
      %p189 = pneg %p101
      %p190 = pneg %p130
      %p191 = pneg %p127
      %p192 = scmp.lt.s32.totalorder %s15, 1
      %s193 = scalar_select %p192, %s15, 1
      %s194 = scalar_lea.vmem %s4, %s193
      %p195 = scmp.lt.s32.totalorder %s15, 1
      %s196 = scalar_select %p195, %s15, 1
      %s197 = scalar_lea.vmem %s0, %s196
      %p198 = scmp.lt.s32.totalorder %s15, 1
      %s199 = scalar_select %p198, %s15, 1
      %s200 = smul.addr %s199, 8
      %s201 = scalar_lea.vmem %s1, %s200
      %p202 = scmp.lt.s32.totalorder %s15, 1
      %s203 = scalar_select %p202, %s15, 1
      %s204 = scalar_lea.vmem %s4, %s203
      %v206 = vld [vmem:[%s197] sm:$0x1]
      %vm207 = vcmask 57344
      %v208 = vsel %vm207, %v206, 0.0
      %209 = vadd.xlane.f32.xlu0 %v208
      %v210 = vpop.xlane.xlu0 %209
      %v211 = vrcp.pop %v210
      %v212 = vmul.f32 %v206, %v211
      %v213 = vld [vmem:[%s201] sm:$0xff]
      %vm214 = vcmask 64512
      %v216 = vsel %vm214, %v212, 0
      %218 = vmatprep.subr.mxu0 0.0
      %219 = vmatpush1.msra.mxu0 %v213
      %220 = vmatprep.subr.mxu0 0.0
      %221 = vmatpush1.msra.mxu0 0.0
      %222 = vmatprep.subr.mxu0 0.0
      %223 = vmatpush1.msra.mxu0 0.0
      %224 = vmatprep.subr.mxu0 0.0
      %225 = vmatpush1.msra.mxu0 0.0
      %226 = vmatprep.subr.mxu0 0.0
      %227 = vmatpush1.msra.mxu0 0.0
      %228 = vmatprep.subr.mxu0 0.0
      %229 = vmatpush1.msra.mxu0 0.0
      %230 = vmatprep.subr.mxu0 0.0
      %231 = vmatpush1.msra.mxu0 0.0
      %232 = vmatprep.subr.mxu0 0.0
      %233 = vmatpush1.msra.mxu0 0.0
      %234 = vmatprep.subr.mxu0 0.0
      %235 = vmatpush1.msra.mxu0 0.0
      %236 = vmatprep.subr.mxu0 0.0
      %237 = vmatpush1.msra.mxu0 0.0
      %238 = vmatprep.subr.mxu0 0.0
      %239 = vmatpush1.msra.mxu0 0.0
      %240 = vmatprep.subr.mxu0 0.0
      %241 = vmatpush1.msra.mxu0 0.0
      %242 = vmatprep.subr.mxu0 0.0
      %243 = vmatpush1.msra.mxu0 0.0
      %244 = vmatprep.subr.mxu0 0.0
      %245 = vmatpush1.msra.mxu0 0.0
      %246 = vmatprep.subr.mxu0 0.0
      %247 = vmatpush1.msra.mxu0 0.0
      %248 = vmatprep.subr.mxu0 0.0
      %249 = vmatpush1.msra.mxu0 0.0
      %250 = vmatprep.subr.mxu0 0.0
      %251 = vmatpush1.msra.mxu0 0.0
      %252 = vmatprep.subr.mxu0 0.0
      %253 = vmatpush1.msra.mxu0 0.0
      %254 = vmatprep.subr.mxu0 0.0
      %255 = vmatpush1.msra.mxu0 0.0
      %256 = vmatprep.subr.mxu0 0.0
      %257 = vmatpush1.msra.mxu0 0.0
      %258 = vmatprep.subr.mxu0 0.0
      %259 = vmatpush1.msra.mxu0 0.0
      %260 = vmatprep.subr.mxu0 0.0
      %261 = vmatpush1.msra.mxu0 0.0
      %262 = vmatprep.subr.mxu0 0.0
      %263 = vmatpush1.msra.mxu0 0.0
      %264 = vmatprep.subr.mxu0 0.0
      %265 = vmatpush1.msra.mxu0 0.0
      %266 = vmatprep.subr.mxu0 0.0
      %267 = vmatpush1.msra.mxu0 0.0
      %268 = vmatprep.subr.mxu0 0.0
      %269 = vmatpush1.msra.mxu0 0.0
      %270 = vmatprep.subr.mxu0 0.0
      %271 = vmatpush1.msra.mxu0 0.0
      %272 = vmatprep.subr.mxu0 0.0
      %273 = vmatpush1.msra.mxu0 0.0
      %274 = vmatprep.subr.mxu0 0.0
      %275 = vmatpush1.msra.mxu0 0.0
      %276 = vmatprep.subr.mxu0 0.0
      %277 = vmatpush1.msra.mxu0 0.0
      %278 = vmatprep.subr.mxu0 0.0
      %279 = vmatpush1.msra.mxu0 0.0
      %280 = vmatprep.subr.mxu0 0.0
      %281 = vmatpush1.msra.mxu0 0.0
      %282 = vmatprep.mubr.f32.mxu0 0.0
      %283 = vmatmul.mubr.f32.gmra.mrb[0].mxu0 %v216
      %v284 = vpop.f32.mrb[0].mxu0
      %v285 = vadd.f32 0.0, %v284
      %v286 = vpop.f32.mrb[0].mxu0
      %287 = vdwg.mxu0
      %v288 = vpack.c.bf16 %v285, %v285
      %v289 = vld [vmem:[%s2] sm:$0xf]
      %v290 = vld [vmem:[%s2 + $0x4] sm:$0xf]
      %v291 = vld [vmem:[%s2 + $0x8] sm:$0xf]
      %v292 = vld [vmem:[%s2 + $0xc] sm:$0xf]
      %v293 = vld [vmem:[%s3] sm:$0x1]
      %v298 = vunpack.c.l.b16 %v289
      %v299 = vunpack.c.l.b16 %v290
      %v300 = vunpack.c.l.b16 %v291
      %v301 = vunpack.c.l.b16 %v292
      %v302 = vpack.c.b16 %v299, %v298
      %v303 = vpack.c.b16 %v301, %v300
      %vm306 = vcmask 261120
      %v308 = vsel %vm306, %v288, 0
      %310 = vmatprep.subr.bf16.mxu0 0
      %311 = vmatpush1.bf16.msra.mxu0 %v302
      %312 = vmatprep.subr.bf16.mxu0 0
      %313 = vmatpush1.bf16.msra.mxu0 %v303
      %314 = vmatprep.subr.bf16.mxu0 0
      %315 = vmatpush1.bf16.msra.mxu0 0
      %316 = vmatprep.subr.bf16.mxu0 0
      %317 = vmatpush1.bf16.msra.mxu0 0
      %318 = vmatprep.subr.bf16.mxu0 0
      %319 = vmatpush1.bf16.msra.mxu0 0
      %320 = vmatprep.subr.bf16.mxu0 0
      %321 = vmatpush1.bf16.msra.mxu0 0
      %322 = vmatprep.subr.bf16.mxu0 0
      %323 = vmatpush1.bf16.msra.mxu0 0
      %324 = vmatprep.subr.bf16.mxu0 0
      %325 = vmatpush1.bf16.msra.mxu0 0
      %326 = vmatprep.subr.bf16.mxu0 0
      %327 = vmatpush1.bf16.msra.mxu0 0
      %328 = vmatprep.subr.bf16.mxu0 0
      %329 = vmatpush1.bf16.msra.mxu0 0
      %330 = vmatprep.subr.bf16.mxu0 0
      %331 = vmatpush1.bf16.msra.mxu0 0
      %332 = vmatprep.subr.bf16.mxu0 0
      %333 = vmatpush1.bf16.msra.mxu0 0
      %334 = vmatprep.subr.bf16.mxu0 0
      %335 = vmatpush1.bf16.msra.mxu0 0
      %336 = vmatprep.subr.bf16.mxu0 0
      %337 = vmatpush1.bf16.msra.mxu0 0
      %338 = vmatprep.subr.bf16.mxu0 0
      %339 = vmatpush1.bf16.msra.mxu0 0
      %340 = vmatprep.subr.bf16.mxu0 0
      %341 = vmatpush1.bf16.msra.mxu0 0
      %342 = vmatprep.mubr.bf16.mxu0 0
      %343 = vmatmul.mubr.bf16.gmra.mrb[0].mxu0 %v308
      %v344 = vpop.f32.mrb[0].mxu0
      %v345 = vadd.f32 %v293, %v344
      %v346 = vpop.f32.mrb[0].mxu0
      %v347 = vpop.f32.mrb[0].mxu0
      %v348 = vpop.f32.mrb[0].mxu0
      %349 = vdwg.mxu0
      %350 = vst [vmem:[%s204] sm:$0x1] %v345
      %p351 = scmp.lt.s32.totalorder %s15, 1
      %s352 = scalar_select %p351, %s15, 1
      %s353 = scalar_lea.vmem %s4, %s352
      // Predicated region
      $region37: #{bert_multitask_forward.5} parent=35 // pred_check
        %p354 = pneg %p127
      $region38: #{bert_multitask_forward.5} parent=35 // pred_check_branch
        %356 = sbr.rel (%p354) target = $region40
      $region39: #{bert_multitask_forward.5} parent=35 // pred_region
        _
      $region40: #{bert_multitask_forward.5} parent=35 // pred_fallthru
        _
    $region36: #{bert_multitask_forward.5} parent=5 // pred_fallthru
      _
    %p357 = scmp.le.s32.totalorder 2, %s10
    // Predicated region
    $region41: #{bert_multitask_forward.5} parent=5 // pred_check
      %p358 = pneg %p357
    $region42: #{bert_multitask_forward.5} parent=5 // pred_check_branch
      %360 = sbr.rel (%p358) target = $region44
    $region43: #{bert_multitask_forward.5} parent=5 // pred_region
      %s361 = ssub.s32 %s10, 2
      // Predicated region
      $region45: #{bert_multitask_forward.5} parent=43 // pred_check
        %p362 = pneg %p133
      $region46: #{bert_multitask_forward.5} parent=43 // pred_check_branch
        %364 = sbr.rel (%p362) target = $region48
      $region47: #{bert_multitask_forward.5} parent=43 // pred_region
        %p365 = scmp.lt.s32.totalorder %s16, 1
        %s366 = scalar_select %p365, %s16, 1
        %s367 = scalar_lea.vmem %s4, %s366
      $region48: #{bert_multitask_forward.5} parent=43 // pred_fallthru
        _
    $region44: #{bert_multitask_forward.5} parent=5 // pred_fallthru
      _
  $region6: #{bert_multitask_forward.5} parent=0 // loop_footer
    %s14 = sadd.s32 1, %s10
  $region7: #{bert_multitask_forward.5} parent=0 // loop_footer_branch
    %9 = sbr.rel target = $region3
  $region8: #{bert_multitask_forward.5} parent=0 // loop_exit
    _

// kernel: bert_multitask_forward.4
$region0: #{bert_multitask_forward.4}
  #allocation0 [shape = 'u32[]', space=smem, size = 0x4, offset = 0x4, fixed_abs, tag = 'smem constant byte address 0x4 - core index']
  #allocation1 [shape = 'u32[144,128]{1,0:T(1,128)}', space=vmem, size = 0x12000, scoped, tag = 'internal scratch']
  #allocation2 [shape = 'f32[8,32]{1,0:T(8,128)}', space=vmem, size = 0x1000, scoped, tag = 'scratch operand']
  %s0 = inlined_call_operand.vmem [shape: f32[2,8,32], index: 0, kind: input, shape index: {}]
  %s1 = inlined_call_operand.vmem [shape: f32[2,1,8], index: 1, kind: input, shape index: {}]
  %s2 = inlined_call_operand.vmem [shape: bf16[2,32,96], index: 2, kind: input, shape index: {}]
  %s3 = inlined_call_operand.vmem [shape: f32[2,1,96], index: 3, kind: input, shape index: {}]
  %s4 = inlined_call_operand.vmem [shape: bf16[2,32,32], index: 4, kind: input, shape index: {}]
  %s5 = inlined_call_operand.vmem [shape: f32[2,1,32], index: 5, kind: input, shape index: {}]
  %s6 = inlined_call_operand.vmem [shape: f32[2,1,32], index: 6, kind: input, shape index: {}]
  %s7 = inlined_call_operand.vmem [shape: f32[2,1,32], index: 7, kind: input, shape index: {}]
  %s8 = inlined_call_operand.vmem [shape: bf16[2,32,64], index: 8, kind: input, shape index: {}]
  %s9 = inlined_call_operand.vmem [shape: f32[2,1,64], index: 9, kind: input, shape index: {}]
  %s10 = inlined_call_operand.vmem [shape: bf16[2,64,32], index: 10, kind: input, shape index: {}]
  %s11 = inlined_call_operand.vmem [shape: f32[2,1,32], index: 11, kind: input, shape index: {}]
  %s12 = inlined_call_operand.vmem [shape: f32[2,1,32], index: 12, kind: input, shape index: {}]
  %s13 = inlined_call_operand.vmem [shape: f32[2,1,32], index: 13, kind: input, shape index: {}]
  %s14 = inlined_call_operand.vmem [shape: f32[2,8,32], index: 14, kind: output, shape index: {}]
  %s15 = sld [smem:[#allocation0]]
  $region93: #{bert_multitask_forward.4} parent=0
    _
  %s17 = ssub.s32 1, %s15
  %s18 = scalar_select 0, %s17, %s15
  loop: start=0, step=1, limit=6
  $region2: #{bert_multitask_forward.4} parent=0 // loop_pre_header
    _
  $region3: #{bert_multitask_forward.4} parent=0 // loop_header
    %s20 = sphi 0, %s24
    %p21 = scmp.ge.s32.totalorder %s20, 6
    %s27 = sphi 0, %s39
    %s28 = sphi 0, %s35
    %s29 = sphi 0, %s27
    %s30 = sphi 0, %s28
    %s31 = sphi 0, %s29
    %s32 = sphi 0, %s30
    %s42 = sphi 0, %s44
    %s45 = sphi 0, %s42
    %s46 = sphi 0, %s45
    %s62 = sphi 0, %s46
    %s68 = sphi 0, %s70
    %s71 = sphi 0, %s68
    %s72 = sphi 0, %s71
    %s88 = sphi 0, %s72
    %s94 = sphi 0, %s96
    %s97 = sphi 0, %s94
    %s98 = sphi 0, %s97
    %s114 = sphi 0, %s98
    %s120 = sphi 0, %s122
    %s123 = sphi 0, %s120
    %s124 = sphi 0, %s123
    %s140 = sphi 0, %s124
    %s146 = sphi 0, %s148
    %s149 = sphi 0, %s146
    %s150 = sphi 0, %s149
    %s166 = sphi 0, %s150
    %s172 = sphi 0, %s174
    %s175 = sphi 0, %s172
    %s176 = sphi 0, %s175
    %s192 = sphi 0, %s176
    %s198 = sphi 0, %s200
    %s201 = sphi 0, %s198
    %s202 = sphi 0, %s201
    %s218 = sphi 0, %s202
    %s224 = sphi 0, %s226
    %s227 = sphi 0, %s224
    %s228 = sphi 0, %s227
    %s244 = sphi 0, %s228
    %s250 = sphi 0, %s252
    %s253 = sphi 0, %s250
    %s254 = sphi 0, %s253
    %s270 = sphi 0, %s254
    %s276 = sphi 0, %s278
    %s279 = sphi 0, %s276
    %s280 = sphi 0, %s279
    %s296 = sphi 0, %s280
    %s302 = sphi 0, %s304
    %s305 = sphi 0, %s302
    %s306 = sphi 0, %s305
    %s322 = sphi 0, %s306
    %s328 = sphi 0, %s330
    %s331 = sphi 0, %s328
    %s332 = sphi 0, %s331
    %s348 = sphi 0, %s332
    %s354 = sphi 0, %s356
    %s357 = sphi 0, %s354
    %s358 = sphi 0, %s357
    %s374 = sphi 0, %s358
    %s380 = sphi 0, %s382
    %s383 = sphi 0, %s380
    %s384 = sphi 0, %s383
    %s400 = sphi 0, %s384
    %s406 = sphi 0, %s408
    %s409 = sphi 0, %s406
    %s410 = sphi 0, %s409
    %s426 = sphi 0, %s410
  $region4: #{bert_multitask_forward.4} parent=0 // loop_header_branch
    %23 = sbr.rel (%p21) target = $region8
  $region5: #{bert_multitask_forward.4} parent=0 // loop_body
    %s25 = ssub.s32 %s20, 1
    %s26 = ssub.s32 %s20, 2
    %s33 = sadd.s32 1, %s28
    %p34 = scmp.ge.s32.totalorder %s33, 2
    %s35 = scalar_select %p34, 0, %s33
    %s36 = sadd.s32 1, %s27
    %s37 = scalar_select %p34, %s36, %s27
    %p38 = scmp.ge.s32.totalorder %s37, 2
    %s39 = scalar_select %p38, 0, %s37
    %s40 = ssub.s32 %s27, %s39
    %p41 = scmp.eq.s32.totalorder %s40, 0
    %s43 = sadd.s32 %s42, 1
    %s44 = scalar_select %p41, %s42, %s43
    %p47 = pneg %p41
    %p48 = scmp.eq.s32.totalorder %s20, 3
    %p49 = por %p47, %p48
    %p50 = scmp.ne.s32.totalorder %s42, %s45
    %p51 = scmp.eq.s32.totalorder %s20, 0
    %p52 = por %p50, %p51
    %p53 = scmp.ne.s32.totalorder %s42, %s45
    %p54 = scmp.eq.s32.totalorder %s25, 3
    %p55 = por %p53, %p54
    %p56 = scmp.ne.s32.totalorder %s45, %s46
    %p57 = scmp.eq.s32.totalorder %s25, 0
    %p58 = por %p56, %p57
    %p59 = scmp.ne.s32.totalorder %s45, %s46
    %p60 = scmp.eq.s32.totalorder %s26, 3
    %p61 = por %p59, %p60
    %p63 = scmp.ne.s32.totalorder %s46, %s62
    %p64 = scmp.eq.s32.totalorder %s26, 0
    %p65 = por %p63, %p64
    %s66 = ssub.s32 %s27, %s39
    %p67 = scmp.eq.s32.totalorder %s66, 0
    %s69 = sadd.s32 %s68, 1
    %s70 = scalar_select %p67, %s68, %s69
    %p73 = pneg %p67
    %p74 = scmp.eq.s32.totalorder %s20, 3
    %p75 = por %p73, %p74
    %p76 = scmp.ne.s32.totalorder %s68, %s71
    %p77 = scmp.eq.s32.totalorder %s20, 0
    %p78 = por %p76, %p77
    %p79 = scmp.ne.s32.totalorder %s68, %s71
    %p80 = scmp.eq.s32.totalorder %s25, 3
    %p81 = por %p79, %p80
    %p82 = scmp.ne.s32.totalorder %s71, %s72
    %p83 = scmp.eq.s32.totalorder %s25, 0
    %p84 = por %p82, %p83
    %p85 = scmp.ne.s32.totalorder %s71, %s72
    %p86 = scmp.eq.s32.totalorder %s26, 3
    %p87 = por %p85, %p86
    %p89 = scmp.ne.s32.totalorder %s72, %s88
    %p90 = scmp.eq.s32.totalorder %s26, 0
    %p91 = por %p89, %p90
    %s92 = ssub.s32 %s28, %s35
    %p93 = scmp.eq.s32.totalorder %s92, 0
    %s95 = sadd.s32 %s94, 1
    %s96 = scalar_select %p93, %s94, %s95
    %p99 = pneg %p93
    %p100 = scmp.eq.s32.totalorder %s20, 3
    %p101 = por %p99, %p100
    %p102 = scmp.ne.s32.totalorder %s94, %s97
    %p103 = scmp.eq.s32.totalorder %s20, 0
    %p104 = por %p102, %p103
    %p105 = scmp.ne.s32.totalorder %s94, %s97
    %p106 = scmp.eq.s32.totalorder %s25, 3
    %p107 = por %p105, %p106
    %p108 = scmp.ne.s32.totalorder %s97, %s98
    %p109 = scmp.eq.s32.totalorder %s25, 0
    %p110 = por %p108, %p109
    %p111 = scmp.ne.s32.totalorder %s97, %s98
    %p112 = scmp.eq.s32.totalorder %s26, 3
    %p113 = por %p111, %p112
    %p115 = scmp.ne.s32.totalorder %s98, %s114
    %p116 = scmp.eq.s32.totalorder %s26, 0
    %p117 = por %p115, %p116
    %s118 = ssub.s32 %s28, %s35
    %p119 = scmp.eq.s32.totalorder %s118, 0
    %s121 = sadd.s32 %s120, 1
    %s122 = scalar_select %p119, %s120, %s121
    %p125 = pneg %p119
    %p126 = scmp.eq.s32.totalorder %s20, 3
    %p127 = por %p125, %p126
    %p128 = scmp.ne.s32.totalorder %s120, %s123
    %p129 = scmp.eq.s32.totalorder %s20, 0
    %p130 = por %p128, %p129
    %p131 = scmp.ne.s32.totalorder %s120, %s123
    %p132 = scmp.eq.s32.totalorder %s25, 3
    %p133 = por %p131, %p132
    %p134 = scmp.ne.s32.totalorder %s123, %s124
    %p135 = scmp.eq.s32.totalorder %s25, 0
    %p136 = por %p134, %p135
    %p137 = scmp.ne.s32.totalorder %s123, %s124
    %p138 = scmp.eq.s32.totalorder %s26, 3
    %p139 = por %p137, %p138
    %p141 = scmp.ne.s32.totalorder %s124, %s140
    %p142 = scmp.eq.s32.totalorder %s26, 0
    %p143 = por %p141, %p142
    %s144 = ssub.s32 %s28, %s35
    %p145 = scmp.eq.s32.totalorder %s144, 0
    %s147 = sadd.s32 %s146, 1
    %s148 = scalar_select %p145, %s146, %s147
    %p151 = pneg %p145
    %p152 = scmp.eq.s32.totalorder %s20, 3
    %p153 = por %p151, %p152
    %p154 = scmp.ne.s32.totalorder %s146, %s149
    %p155 = scmp.eq.s32.totalorder %s20, 0
    %p156 = por %p154, %p155
    %p157 = scmp.ne.s32.totalorder %s146, %s149
    %p158 = scmp.eq.s32.totalorder %s25, 3
    %p159 = por %p157, %p158
    %p160 = scmp.ne.s32.totalorder %s149, %s150
    %p161 = scmp.eq.s32.totalorder %s25, 0
    %p162 = por %p160, %p161
    %p163 = scmp.ne.s32.totalorder %s149, %s150
    %p164 = scmp.eq.s32.totalorder %s26, 3
    %p165 = por %p163, %p164
    %p167 = scmp.ne.s32.totalorder %s150, %s166
    %p168 = scmp.eq.s32.totalorder %s26, 0
    %p169 = por %p167, %p168
    %s170 = ssub.s32 %s28, %s35
    %p171 = scmp.eq.s32.totalorder %s170, 0
    %s173 = sadd.s32 %s172, 1
    %s174 = scalar_select %p171, %s172, %s173
    %p177 = pneg %p171
    %p178 = scmp.eq.s32.totalorder %s20, 3
    %p179 = por %p177, %p178
    %p180 = scmp.ne.s32.totalorder %s172, %s175
    %p181 = scmp.eq.s32.totalorder %s20, 0
    %p182 = por %p180, %p181
    %p183 = scmp.ne.s32.totalorder %s172, %s175
    %p184 = scmp.eq.s32.totalorder %s25, 3
    %p185 = por %p183, %p184
    %p186 = scmp.ne.s32.totalorder %s175, %s176
    %p187 = scmp.eq.s32.totalorder %s25, 0
    %p188 = por %p186, %p187
    %p189 = scmp.ne.s32.totalorder %s175, %s176
    %p190 = scmp.eq.s32.totalorder %s26, 3
    %p191 = por %p189, %p190
    %p193 = scmp.ne.s32.totalorder %s176, %s192
    %p194 = scmp.eq.s32.totalorder %s26, 0
    %p195 = por %p193, %p194
    %s196 = ssub.s32 %s28, %s35
    %p197 = scmp.eq.s32.totalorder %s196, 0
    %s199 = sadd.s32 %s198, 1
    %s200 = scalar_select %p197, %s198, %s199
    %p203 = pneg %p197
    %p204 = scmp.eq.s32.totalorder %s20, 3
    %p205 = por %p203, %p204
    %p206 = scmp.ne.s32.totalorder %s198, %s201
    %p207 = scmp.eq.s32.totalorder %s20, 0
    %p208 = por %p206, %p207
    %p209 = scmp.ne.s32.totalorder %s198, %s201
    %p210 = scmp.eq.s32.totalorder %s25, 3
    %p211 = por %p209, %p210
    %p212 = scmp.ne.s32.totalorder %s201, %s202
    %p213 = scmp.eq.s32.totalorder %s25, 0
    %p214 = por %p212, %p213
    %p215 = scmp.ne.s32.totalorder %s201, %s202
    %p216 = scmp.eq.s32.totalorder %s26, 3
    %p217 = por %p215, %p216
    %p219 = scmp.ne.s32.totalorder %s202, %s218
    %p220 = scmp.eq.s32.totalorder %s26, 0
    %p221 = por %p219, %p220
    %s222 = ssub.s32 %s28, %s35
    %p223 = scmp.eq.s32.totalorder %s222, 0
    %s225 = sadd.s32 %s224, 1
    %s226 = scalar_select %p223, %s224, %s225
    %p229 = pneg %p223
    %p230 = scmp.eq.s32.totalorder %s20, 3
    %p231 = por %p229, %p230
    %p232 = scmp.ne.s32.totalorder %s224, %s227
    %p233 = scmp.eq.s32.totalorder %s20, 0
    %p234 = por %p232, %p233
    %p235 = scmp.ne.s32.totalorder %s224, %s227
    %p236 = scmp.eq.s32.totalorder %s25, 3
    %p237 = por %p235, %p236
    %p238 = scmp.ne.s32.totalorder %s227, %s228
    %p239 = scmp.eq.s32.totalorder %s25, 0
    %p240 = por %p238, %p239
    %p241 = scmp.ne.s32.totalorder %s227, %s228
    %p242 = scmp.eq.s32.totalorder %s26, 3
    %p243 = por %p241, %p242
    %p245 = scmp.ne.s32.totalorder %s228, %s244
    %p246 = scmp.eq.s32.totalorder %s26, 0
    %p247 = por %p245, %p246
    %s248 = ssub.s32 %s28, %s35
    %p249 = scmp.eq.s32.totalorder %s248, 0
    %s251 = sadd.s32 %s250, 1
    %s252 = scalar_select %p249, %s250, %s251
    %p255 = pneg %p249
    %p256 = scmp.eq.s32.totalorder %s20, 3
    %p257 = por %p255, %p256
    %p258 = scmp.ne.s32.totalorder %s250, %s253
    %p259 = scmp.eq.s32.totalorder %s20, 0
    %p260 = por %p258, %p259
    %p261 = scmp.ne.s32.totalorder %s250, %s253
    %p262 = scmp.eq.s32.totalorder %s25, 3
    %p263 = por %p261, %p262
    %p264 = scmp.ne.s32.totalorder %s253, %s254
    %p265 = scmp.eq.s32.totalorder %s25, 0
    %p266 = por %p264, %p265
    %p267 = scmp.ne.s32.totalorder %s253, %s254
    %p268 = scmp.eq.s32.totalorder %s26, 3
    %p269 = por %p267, %p268
    %p271 = scmp.ne.s32.totalorder %s254, %s270
    %p272 = scmp.eq.s32.totalorder %s26, 0
    %p273 = por %p271, %p272
    %s274 = ssub.s32 %s28, %s35
    %p275 = scmp.eq.s32.totalorder %s274, 0
    %s277 = sadd.s32 %s276, 1
    %s278 = scalar_select %p275, %s276, %s277
    %p281 = pneg %p275
    %p282 = scmp.eq.s32.totalorder %s20, 3
    %p283 = por %p281, %p282
    %p284 = scmp.ne.s32.totalorder %s276, %s279
    %p285 = scmp.eq.s32.totalorder %s20, 0
    %p286 = por %p284, %p285
    %p287 = scmp.ne.s32.totalorder %s276, %s279
    %p288 = scmp.eq.s32.totalorder %s25, 3
    %p289 = por %p287, %p288
    %p290 = scmp.ne.s32.totalorder %s279, %s280
    %p291 = scmp.eq.s32.totalorder %s25, 0
    %p292 = por %p290, %p291
    %p293 = scmp.ne.s32.totalorder %s279, %s280
    %p294 = scmp.eq.s32.totalorder %s26, 3
    %p295 = por %p293, %p294
    %p297 = scmp.ne.s32.totalorder %s280, %s296
    %p298 = scmp.eq.s32.totalorder %s26, 0
    %p299 = por %p297, %p298
    %s300 = ssub.s32 %s28, %s35
    %p301 = scmp.eq.s32.totalorder %s300, 0
    %s303 = sadd.s32 %s302, 1
    %s304 = scalar_select %p301, %s302, %s303
    %p307 = pneg %p301
    %p308 = scmp.eq.s32.totalorder %s20, 3
    %p309 = por %p307, %p308
    %p310 = scmp.ne.s32.totalorder %s302, %s305
    %p311 = scmp.eq.s32.totalorder %s20, 0
    %p312 = por %p310, %p311
    %p313 = scmp.ne.s32.totalorder %s302, %s305
    %p314 = scmp.eq.s32.totalorder %s25, 3
    %p315 = por %p313, %p314
    %p316 = scmp.ne.s32.totalorder %s305, %s306
    %p317 = scmp.eq.s32.totalorder %s25, 0
    %p318 = por %p316, %p317
    %p319 = scmp.ne.s32.totalorder %s305, %s306
    %p320 = scmp.eq.s32.totalorder %s26, 3
    %p321 = por %p319, %p320
    %p323 = scmp.ne.s32.totalorder %s306, %s322
    %p324 = scmp.eq.s32.totalorder %s26, 0
    %p325 = por %p323, %p324
    %s326 = ssub.s32 %s28, %s35
    %p327 = scmp.eq.s32.totalorder %s326, 0
    %s329 = sadd.s32 %s328, 1
    %s330 = scalar_select %p327, %s328, %s329
    %p333 = pneg %p327
    %p334 = scmp.eq.s32.totalorder %s20, 3
    %p335 = por %p333, %p334
    %p336 = scmp.ne.s32.totalorder %s328, %s331
    %p337 = scmp.eq.s32.totalorder %s20, 0
    %p338 = por %p336, %p337
    %p339 = scmp.ne.s32.totalorder %s328, %s331
    %p340 = scmp.eq.s32.totalorder %s25, 3
    %p341 = por %p339, %p340
    %p342 = scmp.ne.s32.totalorder %s331, %s332
    %p343 = scmp.eq.s32.totalorder %s25, 0
    %p344 = por %p342, %p343
    %p345 = scmp.ne.s32.totalorder %s331, %s332
    %p346 = scmp.eq.s32.totalorder %s26, 3
    %p347 = por %p345, %p346
    %p349 = scmp.ne.s32.totalorder %s332, %s348
    %p350 = scmp.eq.s32.totalorder %s26, 0
    %p351 = por %p349, %p350
    %s352 = ssub.s32 %s28, %s35
    %p353 = scmp.eq.s32.totalorder %s352, 0
    %s355 = sadd.s32 %s354, 1
    %s356 = scalar_select %p353, %s354, %s355
    %p359 = pneg %p353
    %p360 = scmp.eq.s32.totalorder %s20, 3
    %p361 = por %p359, %p360
    %p362 = scmp.ne.s32.totalorder %s354, %s357
    %p363 = scmp.eq.s32.totalorder %s20, 0
    %p364 = por %p362, %p363
    %p365 = scmp.ne.s32.totalorder %s354, %s357
    %p366 = scmp.eq.s32.totalorder %s25, 3
    %p367 = por %p365, %p366
    %p368 = scmp.ne.s32.totalorder %s357, %s358
    %p369 = scmp.eq.s32.totalorder %s25, 0
    %p370 = por %p368, %p369
    %p371 = scmp.ne.s32.totalorder %s357, %s358
    %p372 = scmp.eq.s32.totalorder %s26, 3
    %p373 = por %p371, %p372
    %p375 = scmp.ne.s32.totalorder %s358, %s374
    %p376 = scmp.eq.s32.totalorder %s26, 0
    %p377 = por %p375, %p376
    %s378 = ssub.s32 %s28, %s35
    %p379 = scmp.eq.s32.totalorder %s378, 0
    %s381 = sadd.s32 %s380, 1
    %s382 = scalar_select %p379, %s380, %s381
    %p385 = pneg %p379
    %p386 = scmp.eq.s32.totalorder %s20, 3
    %p387 = por %p385, %p386
    %p388 = scmp.ne.s32.totalorder %s380, %s383
    %p389 = scmp.eq.s32.totalorder %s20, 0
    %p390 = por %p388, %p389
    %p391 = scmp.ne.s32.totalorder %s380, %s383
    %p392 = scmp.eq.s32.totalorder %s25, 3
    %p393 = por %p391, %p392
    %p394 = scmp.ne.s32.totalorder %s383, %s384
    %p395 = scmp.eq.s32.totalorder %s25, 0
    %p396 = por %p394, %p395
    %p397 = scmp.ne.s32.totalorder %s383, %s384
    %p398 = scmp.eq.s32.totalorder %s26, 3
    %p399 = por %p397, %p398
    %p401 = scmp.ne.s32.totalorder %s384, %s400
    %p402 = scmp.eq.s32.totalorder %s26, 0
    %p403 = por %p401, %p402
    %s404 = ssub.s32 %s27, %s39
    %p405 = scmp.eq.s32.totalorder %s404, 0
    %s407 = sadd.s32 %s406, 1
    %s408 = scalar_select %p405, %s406, %s407
    %p411 = pneg %p405
    %p412 = scmp.eq.s32.totalorder %s20, 3
    %p413 = por %p411, %p412
    %p414 = scmp.ne.s32.totalorder %s406, %s409
    %p415 = scmp.eq.s32.totalorder %s20, 0
    %p416 = por %p414, %p415
    %p417 = scmp.ne.s32.totalorder %s406, %s409
    %p418 = scmp.eq.s32.totalorder %s25, 3
    %p419 = por %p417, %p418
    %p420 = scmp.ne.s32.totalorder %s409, %s410
    %p421 = scmp.eq.s32.totalorder %s25, 0
    %p422 = por %p420, %p421
    %p423 = scmp.ne.s32.totalorder %s409, %s410
    %p424 = scmp.eq.s32.totalorder %s26, 3
    %p425 = por %p423, %p424
    %p427 = scmp.ne.s32.totalorder %s410, %s426
    %p428 = scmp.eq.s32.totalorder %s26, 0
    %p429 = por %p427, %p428
    %p430 = scmp.le.s32.totalorder 1, %s20
    %p431 = scmp.lt.s32.totalorder %s20, 5
    %p432 = pnand %p430, %p431
    %p433 = pneg %p432
    // Predicated region
    $region9: #{bert_multitask_forward.4} parent=5 // pred_check
      _
    $region10: #{bert_multitask_forward.4} parent=5 // pred_check_branch
      %435 = sbr.rel (%p432) target = $region12
    $region11: #{bert_multitask_forward.4} parent=5 // pred_region
      %s436 = ssub.s32 %s20, 1
    $region12: #{bert_multitask_forward.4} parent=5 // pred_fallthru
      _
    %p437 = scmp.lt.s32.totalorder %s20, 4
    // Predicated region
    $region13: #{bert_multitask_forward.4} parent=5 // pred_check
      %p438 = pneg %p437
    $region14: #{bert_multitask_forward.4} parent=5 // pred_check_branch
      %440 = sbr.rel (%p438) target = $region16
    $region15: #{bert_multitask_forward.4} parent=5 // pred_region
      // Predicated region
      $region17: #{bert_multitask_forward.4} parent=15 // pred_check
        %p441 = pneg %p52
      $region18: #{bert_multitask_forward.4} parent=15 // pred_check_branch
        %443 = sbr.rel (%p441) target = $region20
      $region19: #{bert_multitask_forward.4} parent=15 // pred_region
        %p444 = scmp.lt.s32.totalorder %s27, 1
        %s445 = scalar_select %p444, %s27, 1
        %s446 = smul.addr %s445, 8
        %s447 = scalar_lea.vmem %s0, %s446
      $region20: #{bert_multitask_forward.4} parent=15 // pred_fallthru
        _
      // Predicated region
      $region21: #{bert_multitask_forward.4} parent=15 // pred_check
        %p448 = pneg %p78
      $region22: #{bert_multitask_forward.4} parent=15 // pred_check_branch
        %450 = sbr.rel (%p448) target = $region24
      $region23: #{bert_multitask_forward.4} parent=15 // pred_region
        %p451 = scmp.lt.s32.totalorder %s27, 1
        %s452 = scalar_select %p451, %s27, 1
        %s453 = scalar_lea.vmem %s1, %s452
      $region24: #{bert_multitask_forward.4} parent=15 // pred_fallthru
        _
      // Predicated region
      $region25: #{bert_multitask_forward.4} parent=15 // pred_check
        %p454 = pneg %p104
      $region26: #{bert_multitask_forward.4} parent=15 // pred_check_branch
        %456 = sbr.rel (%p454) target = $region28
      $region27: #{bert_multitask_forward.4} parent=15 // pred_region
        %p457 = scmp.lt.s32.totalorder %s28, 1
        %s458 = scalar_select %p457, %s28, 1
        %s459 = smul.addr %s458, 4
        %s460 = smul.addr %s459, 4
        %s461 = scalar_lea.vmem %s2, %s460
      $region28: #{bert_multitask_forward.4} parent=15 // pred_fallthru
        _
      // Predicated region
      $region29: #{bert_multitask_forward.4} parent=15 // pred_check
        %p462 = pneg %p130
      $region30: #{bert_multitask_forward.4} parent=15 // pred_check_branch
        %464 = sbr.rel (%p462) target = $region32
      $region31: #{bert_multitask_forward.4} parent=15 // pred_region
        %p465 = scmp.lt.s32.totalorder %s28, 1
        %s466 = scalar_select %p465, %s28, 1
        %s467 = scalar_lea.vmem %s3, %s466
      $region32: #{bert_multitask_forward.4} parent=15 // pred_fallthru
        _
      // Predicated region
      $region33: #{bert_multitask_forward.4} parent=15 // pred_check
        %p468 = pneg %p156
      $region34: #{bert_multitask_forward.4} parent=15 // pred_check_branch
        %470 = sbr.rel (%p468) target = $region36
      $region35: #{bert_multitask_forward.4} parent=15 // pred_region
        %p471 = scmp.lt.s32.totalorder %s28, 1
        %s472 = scalar_select %p471, %s28, 1
        %s473 = smul.addr %s472, 4
        %s474 = smul.addr %s473, 4
        %s475 = scalar_lea.vmem %s4, %s474
      $region36: #{bert_multitask_forward.4} parent=15 // pred_fallthru
        _
      // Predicated region
      $region37: #{bert_multitask_forward.4} parent=15 // pred_check
        %p476 = pneg %p182
      $region38: #{bert_multitask_forward.4} parent=15 // pred_check_branch
        %478 = sbr.rel (%p476) target = $region40
      $region39: #{bert_multitask_forward.4} parent=15 // pred_region
        %p479 = scmp.lt.s32.totalorder %s28, 1
        %s480 = scalar_select %p479, %s28, 1
        %s481 = scalar_lea.vmem %s5, %s480
      $region40: #{bert_multitask_forward.4} parent=15 // pred_fallthru
        _
      // Predicated region
      $region41: #{bert_multitask_forward.4} parent=15 // pred_check
        %p482 = pneg %p208
      $region42: #{bert_multitask_forward.4} parent=15 // pred_check_branch
        %484 = sbr.rel (%p482) target = $region44
      $region43: #{bert_multitask_forward.4} parent=15 // pred_region
        %p485 = scmp.lt.s32.totalorder %s28, 1
        %s486 = scalar_select %p485, %s28, 1
        %s487 = scalar_lea.vmem %s6, %s486
      $region44: #{bert_multitask_forward.4} parent=15 // pred_fallthru
        _
      // Predicated region
      $region45: #{bert_multitask_forward.4} parent=15 // pred_check
        %p488 = pneg %p234
      $region46: #{bert_multitask_forward.4} parent=15 // pred_check_branch
        %490 = sbr.rel (%p488) target = $region48
      $region47: #{bert_multitask_forward.4} parent=15 // pred_region
        %p491 = scmp.lt.s32.totalorder %s28, 1
        %s492 = scalar_select %p491, %s28, 1
        %s493 = scalar_lea.vmem %s7, %s492
      $region48: #{bert_multitask_forward.4} parent=15 // pred_fallthru
        _
      // Predicated region
      $region49: #{bert_multitask_forward.4} parent=15 // pred_check
        %p494 = pneg %p260
      $region50: #{bert_multitask_forward.4} parent=15 // pred_check_branch
        %496 = sbr.rel (%p494) target = $region52
      $region51: #{bert_multitask_forward.4} parent=15 // pred_region
        %p497 = scmp.lt.s32.totalorder %s28, 1
        %s498 = scalar_select %p497, %s28, 1
        %s499 = smul.addr %s498, 4
        %s500 = smul.addr %s499, 4
        %s501 = scalar_lea.vmem %s8, %s500
      $region52: #{bert_multitask_forward.4} parent=15 // pred_fallthru
        _
      // Predicated region
      $region53: #{bert_multitask_forward.4} parent=15 // pred_check
        %p502 = pneg %p286
      $region54: #{bert_multitask_forward.4} parent=15 // pred_check_branch
        %504 = sbr.rel (%p502) target = $region56
      $region55: #{bert_multitask_forward.4} parent=15 // pred_region
        %p505 = scmp.lt.s32.totalorder %s28, 1
        %s506 = scalar_select %p505, %s28, 1
        %s507 = scalar_lea.vmem %s9, %s506
      $region56: #{bert_multitask_forward.4} parent=15 // pred_fallthru
        _
      // Predicated region
      $region57: #{bert_multitask_forward.4} parent=15 // pred_check
        %p508 = pneg %p312
      $region58: #{bert_multitask_forward.4} parent=15 // pred_check_branch
        %510 = sbr.rel (%p508) target = $region60
      $region59: #{bert_multitask_forward.4} parent=15 // pred_region
        %p511 = scmp.lt.s32.totalorder %s28, 1
        %s512 = scalar_select %p511, %s28, 1
        %s513 = smul.addr %s512, 8
        %s514 = smul.addr %s513, 4
        %s515 = scalar_lea.vmem %s10, %s514
      $region60: #{bert_multitask_forward.4} parent=15 // pred_fallthru
        _
      // Predicated region
      $region61: #{bert_multitask_forward.4} parent=15 // pred_check
        %p516 = pneg %p338
      $region62: #{bert_multitask_forward.4} parent=15 // pred_check_branch
        %518 = sbr.rel (%p516) target = $region64
      $region63: #{bert_multitask_forward.4} parent=15 // pred_region
        %p519 = scmp.lt.s32.totalorder %s28, 1
        %s520 = scalar_select %p519, %s28, 1
        %s521 = scalar_lea.vmem %s11, %s520
      $region64: #{bert_multitask_forward.4} parent=15 // pred_fallthru
        _
      // Predicated region
      $region65: #{bert_multitask_forward.4} parent=15 // pred_check
        %p522 = pneg %p364
      $region66: #{bert_multitask_forward.4} parent=15 // pred_check_branch
        %524 = sbr.rel (%p522) target = $region68
      $region67: #{bert_multitask_forward.4} parent=15 // pred_region
        %p525 = scmp.lt.s32.totalorder %s28, 1
        %s526 = scalar_select %p525, %s28, 1
        %s527 = scalar_lea.vmem %s12, %s526
      $region68: #{bert_multitask_forward.4} parent=15 // pred_fallthru
        _
      // Predicated region
      $region69: #{bert_multitask_forward.4} parent=15 // pred_check
        %p528 = pneg %p390
      $region70: #{bert_multitask_forward.4} parent=15 // pred_check_branch
        %530 = sbr.rel (%p528) target = $region72
      $region71: #{bert_multitask_forward.4} parent=15 // pred_region
        %p531 = scmp.lt.s32.totalorder %s28, 1
        %s532 = scalar_select %p531, %s28, 1
        %s533 = scalar_lea.vmem %s13, %s532
      $region72: #{bert_multitask_forward.4} parent=15 // pred_fallthru
        _
    $region16: #{bert_multitask_forward.4} parent=5 // pred_fallthru
      _
    %p534 = scmp.le.s32.totalorder 1, %s20
    %p535 = scmp.lt.s32.totalorder %s20, 5
    %p536 = pnand %p534, %p535
    %p537 = pneg %p536
    // Predicated region
    $region73: #{bert_multitask_forward.4} parent=5 // pred_check
      _
    $region74: #{bert_multitask_forward.4} parent=5 // pred_check_branch
      %539 = sbr.rel (%p536) target = $region76
    $region75: #{bert_multitask_forward.4} parent=5 // pred_region
      %s540 = ssub.s32 %s20, 1
      %p541 = scmp.lt.s32.totalorder %s29, 1
      %s542 = scalar_select %p541, %s29, 1
      %s543 = smul.addr %s542, 8
      %s544 = scalar_lea.vmem %s0, %s543
      %p545 = pneg %p58
      %p546 = pneg %p55
      %p547 = scmp.lt.s32.totalorder %s29, 1
      %s548 = scalar_select %p547, %s29, 1
      %s549 = scalar_lea.vmem %s1, %s548
      %p550 = pneg %p84
      %p551 = pneg %p81
      %p552 = scmp.lt.s32.totalorder %s30, 1
      %s553 = scalar_select %p552, %s30, 1
      %s554 = smul.addr %s553, 4
      %s555 = smul.addr %s554, 4
      %s556 = scalar_lea.vmem %s2, %s555
      %p557 = pneg %p110
      %p558 = pneg %p107
      %p559 = scmp.lt.s32.totalorder %s30, 1
      %s560 = scalar_select %p559, %s30, 1
      %s561 = scalar_lea.vmem %s3, %s560
      %p562 = pneg %p136
      %p563 = pneg %p133
      %p564 = scmp.lt.s32.totalorder %s30, 1
      %s565 = scalar_select %p564, %s30, 1
      %s566 = smul.addr %s565, 4
      %s567 = smul.addr %s566, 4
      %s568 = scalar_lea.vmem %s4, %s567
      %p569 = pneg %p162
      %p570 = pneg %p159
      %p571 = scmp.lt.s32.totalorder %s30, 1
      %s572 = scalar_select %p571, %s30, 1
      %s573 = scalar_lea.vmem %s5, %s572
      %p574 = pneg %p188
      %p575 = pneg %p185
      %p576 = scmp.lt.s32.totalorder %s30, 1
      %s577 = scalar_select %p576, %s30, 1
      %s578 = scalar_lea.vmem %s6, %s577
      %p579 = pneg %p214
      %p580 = pneg %p211
      %p581 = scmp.lt.s32.totalorder %s30, 1
      %s582 = scalar_select %p581, %s30, 1
      %s583 = scalar_lea.vmem %s7, %s582
      %p584 = pneg %p240
      %p585 = pneg %p237
      %p586 = scmp.lt.s32.totalorder %s30, 1
      %s587 = scalar_select %p586, %s30, 1
      %s588 = smul.addr %s587, 4
      %s589 = smul.addr %s588, 4
      %s590 = scalar_lea.vmem %s8, %s589
      %p591 = pneg %p266
      %p592 = pneg %p263
      %p593 = scmp.lt.s32.totalorder %s30, 1
      %s594 = scalar_select %p593, %s30, 1
      %s595 = scalar_lea.vmem %s9, %s594
      %p596 = pneg %p292
      %p597 = pneg %p289
      %p598 = scmp.lt.s32.totalorder %s30, 1
      %s599 = scalar_select %p598, %s30, 1
      %s600 = smul.addr %s599, 8
      %s601 = smul.addr %s600, 4
      %s602 = scalar_lea.vmem %s10, %s601
      %p603 = pneg %p318
      %p604 = pneg %p315
      %p605 = scmp.lt.s32.totalorder %s30, 1
      %s606 = scalar_select %p605, %s30, 1
      %s607 = scalar_lea.vmem %s11, %s606
      %p608 = pneg %p344
      %p609 = pneg %p341
      %p610 = scmp.lt.s32.totalorder %s30, 1
      %s611 = scalar_select %p610, %s30, 1
      %s612 = scalar_lea.vmem %s12, %s611
      %p613 = pneg %p370
      %p614 = pneg %p367
      %p615 = scmp.lt.s32.totalorder %s30, 1
      %s616 = scalar_select %p615, %s30, 1
      %s617 = scalar_lea.vmem %s13, %s616
      %p618 = pneg %p396
      %p619 = pneg %p393
      %p620 = pneg %p422
      %p621 = pneg %p419
      %p622 = scmp.lt.s32.totalorder %s29, 1
      %s623 = scalar_select %p622, %s29, 1
      %s624 = smul.addr %s623, 8
      %s625 = scalar_lea.vmem %s14, %s624
      %p626 = scmp.lt.s32.totalorder %s29, 1
      %s627 = scalar_select %p626, %s29, 1
      %s628 = smul.addr %s627, 8
      %s629 = scalar_lea.vmem %s0, %s628
      %p630 = scmp.lt.s32.totalorder %s29, 1
      %s631 = scalar_select %p630, %s29, 1
      %s632 = scalar_lea.vmem %s1, %s631
      %p633 = scmp.lt.s32.totalorder %s30, 1
      %s634 = scalar_select %p633, %s30, 1
      %s635 = smul.addr %s634, 4
      %s636 = smul.addr %s635, 4
      %s637 = scalar_lea.vmem %s2, %s636
      %p638 = scmp.lt.s32.totalorder %s30, 1
      %s639 = scalar_select %p638, %s30, 1
      %s640 = scalar_lea.vmem %s3, %s639
      %p641 = scmp.lt.s32.totalorder %s30, 1
      %s642 = scalar_select %p641, %s30, 1
      %s643 = smul.addr %s642, 4
      %s644 = smul.addr %s643, 4
      %s645 = scalar_lea.vmem %s4, %s644
      %p646 = scmp.lt.s32.totalorder %s30, 1
      %s647 = scalar_select %p646, %s30, 1
      %s648 = scalar_lea.vmem %s5, %s647
      %p649 = scmp.lt.s32.totalorder %s30, 1
      %s650 = scalar_select %p649, %s30, 1
      %s651 = scalar_lea.vmem %s6, %s650
      %p652 = scmp.lt.s32.totalorder %s30, 1
      %s653 = scalar_select %p652, %s30, 1
      %s654 = scalar_lea.vmem %s7, %s653
      %p655 = scmp.lt.s32.totalorder %s30, 1
      %s656 = scalar_select %p655, %s30, 1
      %s657 = smul.addr %s656, 4
      %s658 = smul.addr %s657, 4
      %s659 = scalar_lea.vmem %s8, %s658
      %p660 = scmp.lt.s32.totalorder %s30, 1
      %s661 = scalar_select %p660, %s30, 1
      %s662 = scalar_lea.vmem %s9, %s661
      %p663 = scmp.lt.s32.totalorder %s30, 1
      %s664 = scalar_select %p663, %s30, 1
      %s665 = smul.addr %s664, 8
      %s666 = smul.addr %s665, 4
      %s667 = scalar_lea.vmem %s10, %s666
      %p668 = scmp.lt.s32.totalorder %s30, 1
      %s669 = scalar_select %p668, %s30, 1
      %s670 = scalar_lea.vmem %s11, %s669
      %p671 = scmp.lt.s32.totalorder %s30, 1
      %s672 = scalar_select %p671, %s30, 1
      %s673 = scalar_lea.vmem %s12, %s672
      %p674 = scmp.lt.s32.totalorder %s30, 1
      %s675 = scalar_select %p674, %s30, 1
      %s676 = scalar_lea.vmem %s13, %s675
      %p677 = scmp.lt.s32.totalorder %s29, 1
      %s678 = scalar_select %p677, %s29, 1
      %s679 = smul.addr %s678, 8
      %s680 = scalar_lea.vmem %s14, %s679
      %p682 = scmp.eq.s32.totalorder %s30, 0
      // Predicated region
      $region77: #{bert_multitask_forward.4} parent=75 // pred_check
        %p683 = pneg %p682
      $region78: #{bert_multitask_forward.4} parent=75 // pred_check_branch
        %685 = sbr.rel (%p683) target = $region80
      $region79: #{bert_multitask_forward.4} parent=75 // pred_region
        %v686 = vld [vmem:[%s629] sm:$0xff]
        %vm687 = vcmask 261120
        %688 = vst.msk [vmem:[%s680] sm:$0xff] %vm687, %v686
      $region80: #{bert_multitask_forward.4} parent=75 // pred_fallthru
        _
      %v689 = vld [vmem:[%s680] sm:$0xff]
      %v690 = vpack.c.bf16 %v689, %v689
      %v691 = vld [vmem:[%s637] sm:$0xf]
      %v692 = vld [vmem:[%s637 + $0x4] sm:$0xf]
      %v693 = vld [vmem:[%s637 + $0x8] sm:$0xf]
      %v694 = vld [vmem:[%s637 + $0xc] sm:$0xf]
      %v695 = vld [vmem:[%s640] sm:$0x1]
      %v697 = vlaneseq
      %v698 = vshrl.u32 %v697, 7
      %v699 = vsub.s32 0, %v698
      %v700 = vrot.slane %v695, %v699
      %v706 = vunpack.c.l.b16 %v691
      %v707 = vunpack.c.l.b16 %v692
      %v708 = vunpack.c.l.b16 %v693
      %v709 = vunpack.c.l.b16 %v694
      %v710 = vpack.c.b16 %v707, %v706
      %v711 = vpack.c.b16 %v709, %v708
      %vm714 = vcmask 261120
      %v716 = vsel %vm714, %v690, 0
      %718 = vmatprep.subr.bf16.mxu0 0
      %719 = vmatpush1.bf16.msra.mxu0 %v710
      %720 = vmatprep.subr.bf16.mxu0 0
      %721 = vmatpush1.bf16.msra.mxu0 %v711
      %722 = vmatprep.subr.bf16.mxu0 0
      %723 = vmatpush1.bf16.msra.mxu0 0
      %724 = vmatprep.subr.bf16.mxu0 0
      %725 = vmatpush1.bf16.msra.mxu0 0
      %726 = vmatprep.subr.bf16.mxu0 0
      %727 = vmatpush1.bf16.msra.mxu0 0
      %728 = vmatprep.subr.bf16.mxu0 0
      %729 = vmatpush1.bf16.msra.mxu0 0
      %730 = vmatprep.subr.bf16.mxu0 0
      %731 = vmatpush1.bf16.msra.mxu0 0
      %732 = vmatprep.subr.bf16.mxu0 0
      %733 = vmatpush1.bf16.msra.mxu0 0
      %734 = vmatprep.subr.bf16.mxu0 0
      %735 = vmatpush1.bf16.msra.mxu0 0
      %736 = vmatprep.subr.bf16.mxu0 0
      %737 = vmatpush1.bf16.msra.mxu0 0
      %738 = vmatprep.subr.bf16.mxu0 0
      %739 = vmatpush1.bf16.msra.mxu0 0
      %740 = vmatprep.subr.bf16.mxu0 0
      %741 = vmatpush1.bf16.msra.mxu0 0
      %742 = vmatprep.subr.bf16.mxu0 0
      %743 = vmatpush1.bf16.msra.mxu0 0
      %744 = vmatprep.subr.bf16.mxu0 0
      %745 = vmatpush1.bf16.msra.mxu0 0
      %746 = vmatprep.subr.bf16.mxu0 0
      %747 = vmatpush1.bf16.msra.mxu0 0
      %748 = vmatprep.subr.bf16.mxu0 0
      %749 = vmatpush1.bf16.msra.mxu0 0
      %750 = vmatprep.mubr.bf16.mxu0 0
      %751 = vmatmul.mubr.bf16.gmra.mrb[0].mxu0 %v716
      %v752 = vpop.f32.mrb[0].mxu0
      %v753 = vadd.f32 %v700, %v752
      %v754 = vpop.f32.mrb[0].mxu0
      %v755 = vpop.f32.mrb[0].mxu0
      %v756 = vpop.f32.mrb[0].mxu0
      %757 = vdwg.mxu0
      %v758 = vld [vmem:[%s632] sm:$0x1]
      %v760 = vlaneseq
      %v761 = vshrl.u32 %v760, 7
      %v762 = vsub.s32 0, %v761
      %v763 = vrot.slane %v758, %v762
      %v765 = vpack.c.bf16 %v753, %v753
      %767 = vrot.lane.b32.xlu0 %v765, 96
      %v768 = vpop.permute.xlu0 %767
      %vm769 = vcmask 64512
      %v771 = vsel %vm769, %v765, 0
      %v774 = vsel %vm769, %v768, 0
      %776 = vmatprep.subr.bf16.mxu0 0
      %777 = vmatpush1.bf16.xpose.msra.mxu0 %v774
      %778 = vmatprep.subr.bf16.mxu0 0
      %779 = vmatpush1.bf16.xpose.msra.mxu0 0
      %780 = vmatprep.subr.bf16.mxu0 0
      %781 = vmatpush1.bf16.xpose.msra.mxu0 0
      %782 = vmatprep.subr.bf16.mxu0 0
      %783 = vmatpush1.bf16.xpose.msra.mxu0 0
      %784 = vmatprep.subr.bf16.mxu0 0
      %785 = vmatpush1.bf16.xpose.msra.mxu0 0
      %786 = vmatprep.subr.bf16.mxu0 0
      %787 = vmatpush1.bf16.xpose.msra.mxu0 0
      %788 = vmatprep.subr.bf16.mxu0 0
      %789 = vmatpush1.bf16.xpose.msra.mxu0 0
      %790 = vmatprep.subr.bf16.mxu0 0
      %791 = vmatpush1.bf16.xpose.msra.mxu0 0
      %792 = vmatprep.subr.bf16.mxu0 0
      %793 = vmatpush1.bf16.xpose.msra.mxu0 0
      %794 = vmatprep.subr.bf16.mxu0 0
      %795 = vmatpush1.bf16.xpose.msra.mxu0 0
      %796 = vmatprep.subr.bf16.mxu0 0
      %797 = vmatpush1.bf16.xpose.msra.mxu0 0
      %798 = vmatprep.subr.bf16.mxu0 0
      %799 = vmatpush1.bf16.xpose.msra.mxu0 0
      %800 = vmatprep.subr.bf16.mxu0 0
      %801 = vmatpush1.bf16.xpose.msra.mxu0 0
      %802 = vmatprep.subr.bf16.mxu0 0
      %803 = vmatpush1.bf16.xpose.msra.mxu0 0
      %804 = vmatprep.subr.bf16.mxu0 0
      %805 = vmatpush1.bf16.xpose.msra.mxu0 0
      %806 = vmatprep.subr.bf16.mxu0 0
      %807 = vmatpush1.bf16.xpose.msra.mxu0 0
      %808 = vmatprep.mubr.bf16.mxu0 0
      %809 = vmatmul.mubr.bf16.gmra.mrb[0].mxu0 %v771
      %v810 = vpop.f32.mrb[0].mxu0
      %v811 = vadd.f32 0.0, %v810
      %v812 = vpop.f32.mrb[0].mxu0
      %v813 = vpop.f32.mrb[0].mxu0
      %v814 = vpop.f32.mrb[0].mxu0
      %815 = vdwg.mxu0
      %v816 = vmul.f32 %v811, 0.35355338
      %v817 = vadd.f32 %v816, %v763
      %v818 = vsel %vm769, %v817, -inf
      %819 = vmax.xlane.f32.xlu0 %v818
      %v820 = vpop.xlane.xlu0 %819
      %v821 = vsub.f32 %v817, %v820
      %v822 = vmul.f32 %v821, 1.442695
      %v823 = vpow.pop %v822
      %v824 = vsel %vm769, %v823, 0.0
      %825 = vadd.xlane.f32.xlu0 %v824
      %v826 = vpop.xlane.xlu0 %825
      %v827 = vrcp.pop %v826
      %v828 = vmul.f32 %v823, %v827
      %v829 = vpack.c.bf16 %v828, %v828
      %830 = vrot.lane.b32.xlu0 %v765, 64
      %v831 = vpop.permute.xlu0 %830
      %v833 = vsel %vm769, %v829, 0
      %vm835 = vcmask 1043456
      %v837 = vsel %vm835, %v831, 0
      %839 = vmatprep.subr.bf16.mxu0 0
      %840 = vmatpush1.bf16.msra.mxu0 %v837
      %841 = vmatprep.subr.bf16.mxu0 0
      %842 = vmatpush1.bf16.msra.mxu0 0
      %843 = vmatprep.subr.bf16.mxu0 0
      %844 = vmatpush1.bf16.msra.mxu0 0
      %845 = vmatprep.subr.bf16.mxu0 0
      %846 = vmatpush1.bf16.msra.mxu0 0
      %847 = vmatprep.subr.bf16.mxu0 0
      %848 = vmatpush1.bf16.msra.mxu0 0
      %849 = vmatprep.subr.bf16.mxu0 0
      %850 = vmatpush1.bf16.msra.mxu0 0
      %851 = vmatprep.subr.bf16.mxu0 0
      %852 = vmatpush1.bf16.msra.mxu0 0
      %853 = vmatprep.subr.bf16.mxu0 0
      %854 = vmatpush1.bf16.msra.mxu0 0
      %855 = vmatprep.subr.bf16.mxu0 0
      %856 = vmatpush1.bf16.msra.mxu0 0
      %857 = vmatprep.subr.bf16.mxu0 0
      %858 = vmatpush1.bf16.msra.mxu0 0
      %859 = vmatprep.subr.bf16.mxu0 0
      %860 = vmatpush1.bf16.msra.mxu0 0
      %861 = vmatprep.subr.bf16.mxu0 0
      %862 = vmatpush1.bf16.msra.mxu0 0
      %863 = vmatprep.subr.bf16.mxu0 0
      %864 = vmatpush1.bf16.msra.mxu0 0
      %865 = vmatprep.subr.bf16.mxu0 0
      %866 = vmatpush1.bf16.msra.mxu0 0
      %867 = vmatprep.subr.bf16.mxu0 0
      %868 = vmatpush1.bf16.msra.mxu0 0
      %869 = vmatprep.subr.bf16.mxu0 0
      %870 = vmatpush1.bf16.msra.mxu0 0
      %871 = vmatprep.mubr.bf16.mxu0 0
      %872 = vmatmul.mubr.bf16.gmra.mrb[0].mxu0 %v833
      %v873 = vpop.f32.mrb[0].mxu0
      %v874 = vadd.f32 0.0, %v873
      %v875 = vpop.f32.mrb[0].mxu0
      %v876 = vpop.f32.mrb[0].mxu0
      %v877 = vpop.f32.mrb[0].mxu0
      %878 = vdwg.mxu0
      %879 = vst.msk [vmem:[#allocation2] sm:$0xff] %vm769, %v874
      %880 = vrot.lane.b32.xlu0 %v765, 120
      %v881 = vpop.permute.xlu0 %880
      %882 = vrot.lane.b32.xlu0 %v765, 88
      %v883 = vpop.permute.xlu0 %882
      %v885 = vsel %vm769, %v881, 0
      %v888 = vsel %vm769, %v883, 0
      %890 = vmatprep.subr.bf16.mxu0 0
      %891 = vmatpush1.bf16.xpose.msra.mxu0 %v888
      %892 = vmatprep.subr.bf16.mxu0 0
      %893 = vmatpush1.bf16.xpose.msra.mxu0 0
      %894 = vmatprep.subr.bf16.mxu0 0
      %895 = vmatpush1.bf16.xpose.msra.mxu0 0
      %896 = vmatprep.subr.bf16.mxu0 0
      %897 = vmatpush1.bf16.xpose.msra.mxu0 0
      %898 = vmatprep.subr.bf16.mxu0 0
      %899 = vmatpush1.bf16.xpose.msra.mxu0 0
      %900 = vmatprep.subr.bf16.mxu0 0
      %901 = vmatpush1.bf16.xpose.msra.mxu0 0
      %902 = vmatprep.subr.bf16.mxu0 0
      %903 = vmatpush1.bf16.xpose.msra.mxu0 0
      %904 = vmatprep.subr.bf16.mxu0 0
      %905 = vmatpush1.bf16.xpose.msra.mxu0 0
      %906 = vmatprep.subr.bf16.mxu0 0
      %907 = vmatpush1.bf16.xpose.msra.mxu0 0
      %908 = vmatprep.subr.bf16.mxu0 0
      %909 = vmatpush1.bf16.xpose.msra.mxu0 0
      %910 = vmatprep.subr.bf16.mxu0 0
      %911 = vmatpush1.bf16.xpose.msra.mxu0 0
      %912 = vmatprep.subr.bf16.mxu0 0
      %913 = vmatpush1.bf16.xpose.msra.mxu0 0
      %914 = vmatprep.subr.bf16.mxu0 0
      %915 = vmatpush1.bf16.xpose.msra.mxu0 0
      %916 = vmatprep.subr.bf16.mxu0 0
      %917 = vmatpush1.bf16.xpose.msra.mxu0 0
      %918 = vmatprep.subr.bf16.mxu0 0
      %919 = vmatpush1.bf16.xpose.msra.mxu0 0
      %920 = vmatprep.subr.bf16.mxu0 0
      %921 = vmatpush1.bf16.xpose.msra.mxu0 0
      %922 = vmatprep.mubr.bf16.mxu0 0
      %923 = vmatmul.mubr.bf16.gmra.mrb[0].mxu0 %v885
      %v924 = vpop.f32.mrb[0].mxu0
      %v925 = vadd.f32 0.0, %v924
      %v926 = vpop.f32.mrb[0].mxu0
      %v927 = vpop.f32.mrb[0].mxu0
      %v928 = vpop.f32.mrb[0].mxu0
      %929 = vdwg.mxu0
      %v930 = vmul.f32 %v925, 0.35355338
      %v931 = vadd.f32 %v930, %v763
      %v932 = vsel %vm769, %v931, -inf
      %933 = vmax.xlane.f32.xlu0 %v932
      %v934 = vpop.xlane.xlu0 %933
      %v935 = vsub.f32 %v931, %v934
      %v936 = vmul.f32 %v935, 1.442695
      %v937 = vpow.pop %v936
      %v938 = vsel %vm769, %v937, 0.0
      %939 = vadd.xlane.f32.xlu0 %v938
      %v940 = vpop.xlane.xlu0 %939
      %v941 = vrcp.pop %v940
      %v942 = vmul.f32 %v937, %v941
      %v943 = vpack.c.bf16 %v942, %v942
      %944 = vrot.lane.b32.xlu0 %v765, 56
      %v945 = vpop.permute.xlu0 %944
      %v947 = vsel %vm769, %v943, 0
      %v950 = vsel %vm835, %v945, 0
      %952 = vmatprep.subr.bf16.mxu0 0
      %953 = vmatpush1.bf16.msra.mxu0 %v950
      %954 = vmatprep.subr.bf16.mxu0 0
      %955 = vmatpush1.bf16.msra.mxu0 0
      %956 = vmatprep.subr.bf16.mxu0 0
      %957 = vmatpush1.bf16.msra.mxu0 0
      %958 = vmatprep.subr.bf16.mxu0 0
      %959 = vmatpush1.bf16.msra.mxu0 0
      %960 = vmatprep.subr.bf16.mxu0 0
      %961 = vmatpush1.bf16.msra.mxu0 0
      %962 = vmatprep.subr.bf16.mxu0 0
      %963 = vmatpush1.bf16.msra.mxu0 0
      %964 = vmatprep.subr.bf16.mxu0 0
      %965 = vmatpush1.bf16.msra.mxu0 0
      %966 = vmatprep.subr.bf16.mxu0 0
      %967 = vmatpush1.bf16.msra.mxu0 0
      %968 = vmatprep.subr.bf16.mxu0 0
      %969 = vmatpush1.bf16.msra.mxu0 0
      %970 = vmatprep.subr.bf16.mxu0 0
      %971 = vmatpush1.bf16.msra.mxu0 0
      %972 = vmatprep.subr.bf16.mxu0 0
      %973 = vmatpush1.bf16.msra.mxu0 0
      %974 = vmatprep.subr.bf16.mxu0 0
      %975 = vmatpush1.bf16.msra.mxu0 0
      %976 = vmatprep.subr.bf16.mxu0 0
      %977 = vmatpush1.bf16.msra.mxu0 0
      %978 = vmatprep.subr.bf16.mxu0 0
      %979 = vmatpush1.bf16.msra.mxu0 0
      %980 = vmatprep.subr.bf16.mxu0 0
      %981 = vmatpush1.bf16.msra.mxu0 0
      %982 = vmatprep.subr.bf16.mxu0 0
      %983 = vmatpush1.bf16.msra.mxu0 0
      %984 = vmatprep.mubr.bf16.mxu0 0
      %985 = vmatmul.mubr.bf16.gmra.mrb[0].mxu0 %v947
      %v986 = vpop.f32.mrb[0].mxu0
      %v987 = vadd.f32 0.0, %v986
      %v988 = vpop.f32.mrb[0].mxu0
      %v989 = vpop.f32.mrb[0].mxu0
      %v990 = vpop.f32.mrb[0].mxu0
      %991 = vdwg.mxu0
      %993 = vrot.lane.b32.xlu0 %v987, 8
      %v994 = vpop.permute.xlu0 %993
      %vm996 = vcmask 130112
      %997 = vst.msk [vmem:[#allocation2] sm:$0xff] %vm996, %v994
      %998 = vrot.lane.b32.xlu0 %v765, 112
      %v999 = vpop.permute.xlu0 %998
      %1000 = vrot.lane.b32.xlu0 %v765, 80
      %v1001 = vpop.permute.xlu0 %1000
      %v1003 = vsel %vm769, %v999, 0
      %v1006 = vsel %vm769, %v1001, 0
      %1008 = vmatprep.subr.bf16.mxu0 0
      %1009 = vmatpush1.bf16.xpose.msra.mxu0 %v1006
      %1010 = vmatprep.subr.bf16.mxu0 0
      %1011 = vmatpush1.bf16.xpose.msra.mxu0 0
      %1012 = vmatprep.subr.bf16.mxu0 0
      %1013 = vmatpush1.bf16.xpose.msra.mxu0 0
      %1014 = vmatprep.subr.bf16.mxu0 0
      %1015 = vmatpush1.bf16.xpose.msra.mxu0 0
      %1016 = vmatprep.subr.bf16.mxu0 0
      %1017 = vmatpush1.bf16.xpose.msra.mxu0 0
      %1018 = vmatprep.subr.bf16.mxu0 0
      %1019 = vmatpush1.bf16.xpose.msra.mxu0 0
      %1020 = vmatprep.subr.bf16.mxu0 0
      %1021 = vmatpush1.bf16.xpose.msra.mxu0 0
      %1022 = vmatprep.subr.bf16.mxu0 0
      %1023 = vmatpush1.bf16.xpose.msra.mxu0 0
      %1024 = vmatprep.subr.bf16.mxu0 0
      %1025 = vmatpush1.bf16.xpose.msra.mxu0 0
      %1026 = vmatprep.subr.bf16.mxu0 0
      %1027 = vmatpush1.bf16.xpose.msra.mxu0 0
      %1028 = vmatprep.subr.bf16.mxu0 0
      %1029 = vmatpush1.bf16.xpose.msra.mxu0 0
      %1030 = vmatprep.subr.bf16.mxu0 0
      %1031 = vmatpush1.bf16.xpose.msra.mxu0 0
      %1032 = vmatprep.subr.bf16.mxu0 0
      %1033 = vmatpush1.bf16.xpose.msra.mxu0 0
      %1034 = vmatprep.subr.bf16.mxu0 0
      %1035 = vmatpush1.bf16.xpose.msra.mxu0 0
      %1036 = vmatprep.subr.bf16.mxu0 0
      %1037 = vmatpush1.bf16.xpose.msra.mxu0 0
      %1038 = vmatprep.subr.bf16.mxu0 0
      %1039 = vmatpush1.bf16.xpose.msra.mxu0 0
      %1040 = vmatprep.mubr.bf16.mxu0 0
      %1041 = vmatmul.mubr.bf16.gmra.mrb[0].mxu0 %v1003
      %v1042 = vpop.f32.mrb[0].mxu0
      %v1043 = vadd.f32 0.0, %v1042
      %v1044 = vpop.f32.mrb[0].mxu0
      %v1045 = vpop.f32.mrb[0].mxu0
      %v1046 = vpop.f32.mrb[0].mxu0
      %1047 = vdwg.mxu0
      %v1048 = vmul.f32 %v1043, 0.35355338
      %v1049 = vadd.f32 %v1048, %v763
      %v1050 = vsel %vm769, %v1049, -inf
      %1051 = vmax.xlane.f32.xlu0 %v1050
      %v1052 = vpop.xlane.xlu0 %1051
      %v1053 = vsub.f32 %v1049, %v1052
      %v1054 = vmul.f32 %v1053, 1.442695
      %v1055 = vpow.pop %v1054
      %v1056 = vsel %vm769, %v1055, 0.0
      %1057 = vadd.xlane.f32.xlu0 %v1056
      %v1058 = vpop.xlane.xlu0 %1057
      %v1059 = vrcp.pop %v1058
      %v1060 = vmul.f32 %v1055, %v1059
      %v1061 = vpack.c.bf16 %v1060, %v1060
      %1062 = vrot.lane.b32.xlu0 %v765, 48
      %v1063 = vpop.permute.xlu0 %1062
      %v1065 = vsel %vm769, %v1061, 0
      %v1068 = vsel %vm835, %v1063, 0
      %1070 = vmatprep.subr.bf16.mxu0 0
      %1071 = vmatpush1.bf16.msra.mxu0 %v1068
      %1072 = vmatprep.subr.bf16.mxu0 0
      %1073 = vmatpush1.bf16.msra.mxu0 0
      %1074 = vmatprep.subr.bf16.mxu0 0
      %1075 = vmatpush1.bf16.msra.mxu0 0
      %1076 = vmatprep.subr.bf16.mxu0 0
      %1077 = vmatpush1.bf16.msra.mxu0 0
      %1078 = vmatprep.subr.bf16.mxu0 0
      %1079 = vmatpush1.bf16.msra.mxu0 0
      %1080 = vmatprep.subr.bf16.mxu0 0
      %1081 = vmatpush1.bf16.msra.mxu0 0
      %1082 = vmatprep.subr.bf16.mxu0 0
      %1083 = vmatpush1.bf16.msra.mxu0 0
      %1084 = vmatprep.subr.bf16.mxu0 0
      %1085 = vmatpush1.bf16.msra.mxu0 0
      %1086 = vmatprep.subr.bf16.mxu0 0
      %1087 = vmatpush1.bf16.msra.mxu0 0
      %1088 = vmatprep.subr.bf16.mxu0 0
      %1089 = vmatpush1.bf16.msra.mxu0 0
      %1090 = vmatprep.subr.bf16.mxu0 0
      %1091 = vmatpush1.bf16.msra.mxu0 0
      %1092 = vmatprep.subr.bf16.mxu0 0
      %1093 = vmatpush1.bf16.msra.mxu0 0
      %1094 = vmatprep.subr.bf16.mxu0 0
      %1095 = vmatpush1.bf16.msra.mxu0 0
      %1096 = vmatprep.subr.bf16.mxu0 0
      %1097 = vmatpush1.bf16.msra.mxu0 0
      %1098 = vmatprep.subr.bf16.mxu0 0
      %1099 = vmatpush1.bf16.msra.mxu0 0
      %1100 = vmatprep.subr.bf16.mxu0 0
      %1101 = vmatpush1.bf16.msra.mxu0 0
      %1102 = vmatprep.mubr.bf16.mxu0 0
      %1103 = vmatmul.mubr.bf16.gmra.mrb[0].mxu0 %v1065
      %v1104 = vpop.f32.mrb[0].mxu0
      %v1105 = vadd.f32 0.0, %v1104
      %v1106 = vpop.f32.mrb[0].mxu0
      %v1107 = vpop.f32.mrb[0].mxu0
      %v1108 = vpop.f32.mrb[0].mxu0
      %1109 = vdwg.mxu0
      %1111 = vrot.lane.b32.xlu0 %v1105, 16
      %v1112 = vpop.permute.xlu0 %1111
      %vm1114 = vcmask 195712
      %1115 = vst.msk [vmem:[#allocation2] sm:$0xff] %vm1114, %v1112
      %1116 = vrot.lane.b32.xlu0 %v765, 104
      %v1117 = vpop.permute.xlu0 %1116
      %1118 = vrot.lane.b32.xlu0 %v765, 72
      %v1119 = vpop.permute.xlu0 %1118
      %v1121 = vsel %vm769, %v1117, 0
      %v1124 = vsel %vm769, %v1119, 0
      %1126 = vmatprep.subr.bf16.mxu0 0
      %1127 = vmatpush1.bf16.xpose.msra.mxu0 %v1124
      %1128 = vmatprep.subr.bf16.mxu0 0
      %1129 = vmatpush1.bf16.xpose.msra.mxu0 0
      %1130 = vmatprep.subr.bf16.mxu0 0
      %1131 = vmatpush1.bf16.xpose.msra.mxu0 0
      %1132 = vmatprep.subr.bf16.mxu0 0
      %1133 = vmatpush1.bf16.xpose.msra.mxu0 0
      %1134 = vmatprep.subr.bf16.mxu0 0
      %1135 = vmatpush1.bf16.xpose.msra.mxu0 0
      %1136 = vmatprep.subr.bf16.mxu0 0
      %1137 = vmatpush1.bf16.xpose.msra.mxu0 0
      %1138 = vmatprep.subr.bf16.mxu0 0
      %1139 = vmatpush1.bf16.xpose.msra.mxu0 0
      %1140 = vmatprep.subr.bf16.mxu0 0
      %1141 = vmatpush1.bf16.xpose.msra.mxu0 0
      %1142 = vmatprep.subr.bf16.mxu0 0
      %1143 = vmatpush1.bf16.xpose.msra.mxu0 0
      %1144 = vmatprep.subr.bf16.mxu0 0
      %1145 = vmatpush1.bf16.xpose.msra.mxu0 0
      %1146 = vmatprep.subr.bf16.mxu0 0
      %1147 = vmatpush1.bf16.xpose.msra.mxu0 0
      %1148 = vmatprep.subr.bf16.mxu0 0
      %1149 = vmatpush1.bf16.xpose.msra.mxu0 0
      %1150 = vmatprep.subr.bf16.mxu0 0
      %1151 = vmatpush1.bf16.xpose.msra.mxu0 0
      %1152 = vmatprep.subr.bf16.mxu0 0
      %1153 = vmatpush1.bf16.xpose.msra.mxu0 0
      %1154 = vmatprep.subr.bf16.mxu0 0
      %1155 = vmatpush1.bf16.xpose.msra.mxu0 0
      %1156 = vmatprep.subr.bf16.mxu0 0
      %1157 = vmatpush1.bf16.xpose.msra.mxu0 0
      %1158 = vmatprep.mubr.bf16.mxu0 0
      %1159 = vmatmul.mubr.bf16.gmra.mrb[0].mxu0 %v1121
      %v1160 = vpop.f32.mrb[0].mxu0
      %v1161 = vadd.f32 0.0, %v1160
      %v1162 = vpop.f32.mrb[0].mxu0
      %v1163 = vpop.f32.mrb[0].mxu0
      %v1164 = vpop.f32.mrb[0].mxu0
      %1165 = vdwg.mxu0
      %v1166 = vmul.f32 %v1161, 0.35355338
      %v1167 = vadd.f32 %v1166, %v763
      %v1168 = vsel %vm769, %v1167, -inf
      %1169 = vmax.xlane.f32.xlu0 %v1168
      %v1170 = vpop.xlane.xlu0 %1169
      %v1171 = vsub.f32 %v1167, %v1170
      %v1172 = vmul.f32 %v1171, 1.442695
      %v1173 = vpow.pop %v1172
      %v1174 = vsel %vm769, %v1173, 0.0
      %1175 = vadd.xlane.f32.xlu0 %v1174
      %v1176 = vpop.xlane.xlu0 %1175
      %v1177 = vrcp.pop %v1176
      %v1178 = vmul.f32 %v1173, %v1177
      %v1179 = vpack.c.bf16 %v1178, %v1178
      %1180 = vrot.lane.b32.xlu0 %v765, 40
      %v1181 = vpop.permute.xlu0 %1180
      %v1183 = vsel %vm769, %v1179, 0
      %v1186 = vsel %vm835, %v1181, 0
      %1188 = vmatprep.subr.bf16.mxu0 0
      %1189 = vmatpush1.bf16.msra.mxu0 %v1186
      %1190 = vmatprep.subr.bf16.mxu0 0
      %1191 = vmatpush1.bf16.msra.mxu0 0
      %1192 = vmatprep.subr.bf16.mxu0 0
      %1193 = vmatpush1.bf16.msra.mxu0 0
      %1194 = vmatprep.subr.bf16.mxu0 0
      %1195 = vmatpush1.bf16.msra.mxu0 0
      %1196 = vmatprep.subr.bf16.mxu0 0
      %1197 = vmatpush1.bf16.msra.mxu0 0
      %1198 = vmatprep.subr.bf16.mxu0 0
      %1199 = vmatpush1.bf16.msra.mxu0 0
      %1200 = vmatprep.subr.bf16.mxu0 0
      %1201 = vmatpush1.bf16.msra.mxu0 0
      %1202 = vmatprep.subr.bf16.mxu0 0
      %1203 = vmatpush1.bf16.msra.mxu0 0
      %1204 = vmatprep.subr.bf16.mxu0 0
      %1205 = vmatpush1.bf16.msra.mxu0 0
      %1206 = vmatprep.subr.bf16.mxu0 0
      %1207 = vmatpush1.bf16.msra.mxu0 0
      %1208 = vmatprep.subr.bf16.mxu0 0
      %1209 = vmatpush1.bf16.msra.mxu0 0
      %1210 = vmatprep.subr.bf16.mxu0 0
      %1211 = vmatpush1.bf16.msra.mxu0 0
      %1212 = vmatprep.subr.bf16.mxu0 0
      %1213 = vmatpush1.bf16.msra.mxu0 0
      %1214 = vmatprep.subr.bf16.mxu0 0
      %1215 = vmatpush1.bf16.msra.mxu0 0
      %1216 = vmatprep.subr.bf16.mxu0 0
      %1217 = vmatpush1.bf16.msra.mxu0 0
      %1218 = vmatprep.subr.bf16.mxu0 0
      %1219 = vmatpush1.bf16.msra.mxu0 0
      %1220 = vmatprep.mubr.bf16.mxu0 0
      %1221 = vmatmul.mubr.bf16.gmra.mrb[0].mxu0 %v1183
      %v1222 = vpop.f32.mrb[0].mxu0
      %v1223 = vadd.f32 0.0, %v1222
      %v1224 = vpop.f32.mrb[0].mxu0
      %v1225 = vpop.f32.mrb[0].mxu0
      %v1226 = vpop.f32.mrb[0].mxu0
      %1227 = vdwg.mxu0
      %1229 = vrot.lane.b32.xlu0 %v1223, 24
      %v1230 = vpop.permute.xlu0 %1229
      %vm1232 = vcmask 261312
      %1233 = vst.msk [vmem:[#allocation2] sm:$0xff] %vm1232, %v1230
      %v1234 = vld [vmem:[#allocation2] sm:$0xff]
      %v1235 = vpack.c.bf16 %v1234, %v1234
      %v1236 = vld [vmem:[%s645] sm:$0xf]
      %v1237 = vld [vmem:[%s645 + $0x4] sm:$0xf]
      %v1238 = vld [vmem:[%s645 + $0x8] sm:$0xf]
      %v1239 = vld [vmem:[%s645 + $0xc] sm:$0xf]
      %v1240 = vld [vmem:[%s648] sm:$0x1]
      %v1242 = vlaneseq
      %v1243 = vshrl.u32 %v1242, 7
      %v1244 = vsub.s32 0, %v1243
      %v1245 = vrot.slane %v1240, %v1244
      %v1251 = vunpack.c.l.b16 %v1236
      %v1252 = vunpack.c.l.b16 %v1237
      %v1253 = vunpack.c.l.b16 %v1238
      %v1254 = vunpack.c.l.b16 %v1239
      %v1255 = vpack.c.b16 %v1252, %v1251
      %v1256 = vpack.c.b16 %v1254, %v1253
      %v1260 = vsel %vm714, %v1235, 0
      %1262 = vmatprep.subr.bf16.mxu0 0
      %1263 = vmatpush1.bf16.msra.mxu0 %v1255
      %1264 = vmatprep.subr.bf16.mxu0 0
      %1265 = vmatpush1.bf16.msra.mxu0 %v1256
      %1266 = vmatprep.subr.bf16.mxu0 0
      %1267 = vmatpush1.bf16.msra.mxu0 0
      %1268 = vmatprep.subr.bf16.mxu0 0
      %1269 = vmatpush1.bf16.msra.mxu0 0
      %1270 = vmatprep.subr.bf16.mxu0 0
      %1271 = vmatpush1.bf16.msra.mxu0 0
      %1272 = vmatprep.subr.bf16.mxu0 0
      %1273 = vmatpush1.bf16.msra.mxu0 0
      %1274 = vmatprep.subr.bf16.mxu0 0
      %1275 = vmatpush1.bf16.msra.mxu0 0
      %1276 = vmatprep.subr.bf16.mxu0 0
      %1277 = vmatpush1.bf16.msra.mxu0 0
      %1278 = vmatprep.subr.bf16.mxu0 0
      %1279 = vmatpush1.bf16.msra.mxu0 0
      %1280 = vmatprep.subr.bf16.mxu0 0
      %1281 = vmatpush1.bf16.msra.mxu0 0
      %1282 = vmatprep.subr.bf16.mxu0 0
      %1283 = vmatpush1.bf16.msra.mxu0 0
      %1284 = vmatprep.subr.bf16.mxu0 0
      %1285 = vmatpush1.bf16.msra.mxu0 0
      %1286 = vmatprep.subr.bf16.mxu0 0
      %1287 = vmatpush1.bf16.msra.mxu0 0
      %1288 = vmatprep.subr.bf16.mxu0 0
      %1289 = vmatpush1.bf16.msra.mxu0 0
      %1290 = vmatprep.subr.bf16.mxu0 0
      %1291 = vmatpush1.bf16.msra.mxu0 0
      %1292 = vmatprep.subr.bf16.mxu0 0
      %1293 = vmatpush1.bf16.msra.mxu0 0
      %1294 = vmatprep.mubr.bf16.mxu0 0
      %1295 = vmatmul.mubr.bf16.gmra.mrb[0].mxu0 %v1260
      %v1296 = vpop.f32.mrb[0].mxu0
      %v1297 = vadd.f32 %v1245, %v1296
      %v1298 = vpop.f32.mrb[0].mxu0
      %v1299 = vpop.f32.mrb[0].mxu0
      %v1300 = vpop.f32.mrb[0].mxu0
      %1301 = vdwg.mxu0
      %v1302 = vadd.f32 %v1297, %v689
      %v1303 = vld [vmem:[%s651] sm:$0x1]
      %v1304 = vld [vmem:[%s654] sm:$0x1]
      %v1305 = vsel %vm714, %v1302, 0.0
      %1306 = vadd.xlane.f32.xlu0 %v1305
      %v1307 = vpop.xlane.xlu0 %1306
      %v1308 = vrcp.pop 32.0
      %v1309 = vmul.f32 %v1307, %v1308
      %v1310 = vsub.f32 %v1302, %v1309
      %v1311 = vmul.f32 %v1310, %v1310
      %v1312 = vsel %vm714, %v1311, 0.0
      %1313 = vadd.xlane.f32.xlu0 %v1312
      %v1314 = vpop.xlane.xlu0 %1313
      %v1315 = vmul.f32 %v1314, %v1308
      %v1316 = vadd.f32 %v1315, 1e-12
      %v1317 = vrsqrt.pop %v1316
      %v1318 = vmul.f32 %v1310, %v1317
      %v1320 = vlaneseq
      %v1321 = vshrl.u32 %v1320, 7
      %v1322 = vsub.s32 0, %v1321
      %v1323 = vrot.slane %v1303, %v1322
      %v1325 = vmul.f32 %v1318, %v1323
      %v1327 = vlaneseq
      %v1328 = vshrl.u32 %v1327, 7
      %v1329 = vsub.s32 0, %v1328
      %v1330 = vrot.slane %v1304, %v1329
      %v1332 = vadd.f32 %v1325, %v1330
      %v1333 = vpack.c.bf16 %v1332, %v1332
      %v1334 = vld [vmem:[%s659] sm:$0xf]
      %v1335 = vld [vmem:[%s659 + $0x4] sm:$0xf]
      %v1336 = vld [vmem:[%s659 + $0x8] sm:$0xf]
      %v1337 = vld [vmem:[%s659 + $0xc] sm:$0xf]
      %v1338 = vld [vmem:[%s662] sm:$0x1]
      %v1340 = vlaneseq
      %v1341 = vshrl.u32 %v1340, 7
      %v1342 = vsub.s32 0, %v1341
      %v1343 = vrot.slane %v1338, %v1342
      %v1349 = vunpack.c.l.b16 %v1334
      %v1350 = vunpack.c.l.b16 %v1335
      %v1351 = vunpack.c.l.b16 %v1336
      %v1352 = vunpack.c.l.b16 %v1337
      %v1353 = vpack.c.b16 %v1350, %v1349
      %v1354 = vpack.c.b16 %v1352, %v1351
      %v1358 = vsel %vm714, %v1333, 0
      %1360 = vmatprep.subr.bf16.mxu0 0
      %1361 = vmatpush1.bf16.msra.mxu0 %v1353
      %1362 = vmatprep.subr.bf16.mxu0 0
      %1363 = vmatpush1.bf16.msra.mxu0 %v1354
      %1364 = vmatprep.subr.bf16.mxu0 0
      %1365 = vmatpush1.bf16.msra.mxu0 0
      %1366 = vmatprep.subr.bf16.mxu0 0
      %1367 = vmatpush1.bf16.msra.mxu0 0
      %1368 = vmatprep.subr.bf16.mxu0 0
      %1369 = vmatpush1.bf16.msra.mxu0 0
      %1370 = vmatprep.subr.bf16.mxu0 0
      %1371 = vmatpush1.bf16.msra.mxu0 0
      %1372 = vmatprep.subr.bf16.mxu0 0
      %1373 = vmatpush1.bf16.msra.mxu0 0
      %1374 = vmatprep.subr.bf16.mxu0 0
      %1375 = vmatpush1.bf16.msra.mxu0 0
      %1376 = vmatprep.subr.bf16.mxu0 0
      %1377 = vmatpush1.bf16.msra.mxu0 0
      %1378 = vmatprep.subr.bf16.mxu0 0
      %1379 = vmatpush1.bf16.msra.mxu0 0
      %1380 = vmatprep.subr.bf16.mxu0 0
      %1381 = vmatpush1.bf16.msra.mxu0 0
      %1382 = vmatprep.subr.bf16.mxu0 0
      %1383 = vmatpush1.bf16.msra.mxu0 0
      %1384 = vmatprep.subr.bf16.mxu0 0
      %1385 = vmatpush1.bf16.msra.mxu0 0
      %1386 = vmatprep.subr.bf16.mxu0 0
      %1387 = vmatpush1.bf16.msra.mxu0 0
      %1388 = vmatprep.subr.bf16.mxu0 0
      %1389 = vmatpush1.bf16.msra.mxu0 0
      %1390 = vmatprep.subr.bf16.mxu0 0
      %1391 = vmatpush1.bf16.msra.mxu0 0
      %1392 = vmatprep.mubr.bf16.mxu0 0
      %1393 = vmatmul.mubr.bf16.gmra.mrb[0].mxu0 %v1358
      %v1394 = vpop.f32.mrb[0].mxu0
      %v1395 = vadd.f32 %v1343, %v1394
      %v1396 = vpop.f32.mrb[0].mxu0
      %v1397 = vpop.f32.mrb[0].mxu0
      %v1398 = vpop.f32.mrb[0].mxu0
      %1399 = vdwg.mxu0
      %v1400 = vmul.f32 %v1395, 0.5
      %v1401 = vmul.f32 %v1395, 0.044715
      %v1402 = vmul.f32 %v1401, %v1395
      %v1403 = vmul.f32 %v1402, %v1395
      %v1404 = vadd.f32 %v1395, %v1403
      %v1405 = vmul.f32 %v1404, 0.7978846
      %v1406 = vtanh.pop %v1405
      %v1407 = vadd.f32 %v1406, 1.0
      %v1408 = vmul.f32 %v1400, %v1407
      %v1409 = vpack.c.bf16 %v1408, %v1408
      %v1410 = vld [vmem:[%s667] sm:$0xf]
      %v1411 = vld [vmem:[%s667 + $0x4] sm:$0xf]
      %v1412 = vld [vmem:[%s667 + $0x8] sm:$0xf]
      %v1413 = vld [vmem:[%s667 + $0xc] sm:$0xf]
      %v1414 = vld [vmem:[%s667 + $0x10] sm:$0xf]
      %v1415 = vld [vmem:[%s667 + $0x14] sm:$0xf]
      %v1416 = vld [vmem:[%s667 + $0x18] sm:$0xf]
      %v1417 = vld [vmem:[%s667 + $0x1c] sm:$0xf]
      %v1418 = vld [vmem:[%s670] sm:$0x1]
      %v1420 = vlaneseq
      %v1421 = vshrl.u32 %v1420, 7
      %v1422 = vsub.s32 0, %v1421
      %v1423 = vrot.slane %v1418, %v1422
      %v1433 = vunpack.c.l.b16 %v1410
      %v1434 = vunpack.c.l.b16 %v1411
      %v1435 = vunpack.c.l.b16 %v1412
      %v1436 = vunpack.c.l.b16 %v1413
      %v1437 = vunpack.c.l.b16 %v1414
      %v1438 = vunpack.c.l.b16 %v1415
      %v1439 = vunpack.c.l.b16 %v1416
      %v1440 = vunpack.c.l.b16 %v1417
      %v1441 = vpack.c.b16 %v1434, %v1433
      %v1442 = vpack.c.b16 %v1436, %v1435
      %v1443 = vpack.c.b16 %v1438, %v1437
      %v1444 = vpack.c.b16 %v1440, %v1439
      %vm1449 = vcmask 523264
      %v1451 = vsel %vm1449, %v1409, 0
      %1453 = vmatprep.subr.bf16.mxu0 0
      %1454 = vmatpush1.bf16.msra.mxu0 %v1441
      %1455 = vmatprep.subr.bf16.mxu0 0
      %1456 = vmatpush1.bf16.msra.mxu0 %v1442
      %1457 = vmatprep.subr.bf16.mxu0 0
      %1458 = vmatpush1.bf16.msra.mxu0 %v1443
      %1459 = vmatprep.subr.bf16.mxu0 0
      %1460 = vmatpush1.bf16.msra.mxu0 %v1444
      %1461 = vmatprep.subr.bf16.mxu0 0
      %1462 = vmatpush1.bf16.msra.mxu0 0
      %1463 = vmatprep.subr.bf16.mxu0 0
      %1464 = vmatpush1.bf16.msra.mxu0 0
      %1465 = vmatprep.subr.bf16.mxu0 0
      %1466 = vmatpush1.bf16.msra.mxu0 0
      %1467 = vmatprep.subr.bf16.mxu0 0
      %1468 = vmatpush1.bf16.msra.mxu0 0
      %1469 = vmatprep.subr.bf16.mxu0 0
      %1470 = vmatpush1.bf16.msra.mxu0 0
      %1471 = vmatprep.subr.bf16.mxu0 0
      %1472 = vmatpush1.bf16.msra.mxu0 0
      %1473 = vmatprep.subr.bf16.mxu0 0
      %1474 = vmatpush1.bf16.msra.mxu0 0
      %1475 = vmatprep.subr.bf16.mxu0 0
      %1476 = vmatpush1.bf16.msra.mxu0 0
      %1477 = vmatprep.subr.bf16.mxu0 0
      %1478 = vmatpush1.bf16.msra.mxu0 0
      %1479 = vmatprep.subr.bf16.mxu0 0
      %1480 = vmatpush1.bf16.msra.mxu0 0
      %1481 = vmatprep.subr.bf16.mxu0 0
      %1482 = vmatpush1.bf16.msra.mxu0 0
      %1483 = vmatprep.subr.bf16.mxu0 0
      %1484 = vmatpush1.bf16.msra.mxu0 0
      %1485 = vmatprep.mubr.bf16.mxu0 0
      %1486 = vmatmul.mubr.bf16.gmra.mrb[0].mxu0 %v1451
      %v1487 = vpop.f32.mrb[0].mxu0
      %v1488 = vadd.f32 %v1423, %v1487
      %v1489 = vpop.f32.mrb[0].mxu0
      %v1490 = vpop.f32.mrb[0].mxu0
      %v1491 = vpop.f32.mrb[0].mxu0
      %1492 = vdwg.mxu0
      %v1493 = vadd.f32 %v1488, %v1332
      %v1494 = vld [vmem:[%s673] sm:$0x1]
      %v1495 = vld [vmem:[%s676] sm:$0x1]
      %v1496 = vsel %vm714, %v1493, 0.0
      %1497 = vadd.xlane.f32.xlu0 %v1496
      %v1498 = vpop.xlane.xlu0 %1497
      %v1499 = vmul.f32 %v1498, %v1308
      %v1500 = vsub.f32 %v1493, %v1499
      %v1501 = vmul.f32 %v1500, %v1500
      %v1502 = vsel %vm714, %v1501, 0.0
      %1503 = vadd.xlane.f32.xlu0 %v1502
      %v1504 = vpop.xlane.xlu0 %1503
      %v1505 = vmul.f32 %v1504, %v1308
      %v1506 = vadd.f32 %v1505, 1e-12
      %v1507 = vrsqrt.pop %v1506
      %v1508 = vmul.f32 %v1500, %v1507
      %v1510 = vlaneseq
      %v1511 = vshrl.u32 %v1510, 7
      %v1512 = vsub.s32 0, %v1511
      %v1513 = vrot.slane %v1494, %v1512
      %v1515 = vmul.f32 %v1508, %v1513
      %v1517 = vlaneseq
      %v1518 = vshrl.u32 %v1517, 7
      %v1519 = vsub.s32 0, %v1518
      %v1520 = vrot.slane %v1495, %v1519
      %v1522 = vadd.f32 %v1515, %v1520
      %1523 = vst.msk [vmem:[%s680] sm:$0xff] %vm714, %v1522
      %p1524 = scmp.lt.s32.totalorder %s29, 1
      %s1525 = scalar_select %p1524, %s29, 1
      %s1526 = smul.addr %s1525, 8
      %s1527 = scalar_lea.vmem %s14, %s1526
      // Predicated region
      $region81: #{bert_multitask_forward.4} parent=75 // pred_check
        %p1528 = pneg %p419
      $region82: #{bert_multitask_forward.4} parent=75 // pred_check_branch
        %1530 = sbr.rel (%p1528) target = $region84
      $region83: #{bert_multitask_forward.4} parent=75 // pred_region
        _
      $region84: #{bert_multitask_forward.4} parent=75 // pred_fallthru
        _
    $region76: #{bert_multitask_forward.4} parent=5 // pred_fallthru
      _
    %p1531 = scmp.le.s32.totalorder 2, %s20
    // Predicated region
    $region85: #{bert_multitask_forward.4} parent=5 // pred_check
      %p1532 = pneg %p1531
    $region86: #{bert_multitask_forward.4} parent=5 // pred_check_branch
      %1534 = sbr.rel (%p1532) target = $region88
    $region87: #{bert_multitask_forward.4} parent=5 // pred_region
      %s1535 = ssub.s32 %s20, 2
      // Predicated region
      $region89: #{bert_multitask_forward.4} parent=87 // pred_check
        %p1536 = pneg %p425
      $region90: #{bert_multitask_forward.4} parent=87 // pred_check_branch
        %1538 = sbr.rel (%p1536) target = $region92
      $region91: #{bert_multitask_forward.4} parent=87 // pred_region
        %p1539 = scmp.lt.s32.totalorder %s31, 1
        %s1540 = scalar_select %p1539, %s31, 1
        %s1541 = smul.addr %s1540, 8
        %s1542 = scalar_lea.vmem %s14, %s1541
      $region92: #{bert_multitask_forward.4} parent=87 // pred_fallthru
        _
    $region88: #{bert_multitask_forward.4} parent=5 // pred_fallthru
      _
  $region6: #{bert_multitask_forward.4} parent=0 // loop_footer
    %s24 = sadd.s32 1, %s20
  $region7: #{bert_multitask_forward.4} parent=0 // loop_footer_branch
    %19 = sbr.rel target = $region3
  $region8: #{bert_multitask_forward.4} parent=0 // loop_exit
    _

</llo_original>
